<compile_context>
chip_gen: v7x
topology: tpu7x:2x2x1
jax: 0.10.0
libtpu: 0.0.40
codegen_flags: <defaults>
</compile_context>

<pallas_src>
import functools

import jax
import jax.numpy as jnp
from jax.experimental import pallas as pl
from jax.experimental.pallas import tpu as pltpu


def _layernorm(x, w, b, eps=1e-5):
    mu = jnp.mean(x, axis=-1, keepdims=True)
    var = jnp.mean((x - mu) ** 2, axis=-1, keepdims=True)
    return (x - mu) * jax.lax.rsqrt(var + eps) * w + b


def _encoder_stack_kernel(
    x_ref,                      # (B*S, E)   input activations (consumed at layer 0)
    w_in_ref, b_in_ref,         # (1, E, 3E) bf16, (1, 1, 3E) f32
    w_out_ref, b_out_ref,       # (1, E, E)  bf16, (1, 1, E)  f32
    ln1_w_ref, ln1_b_ref,       # (1, 1, E)  f32
    w1_ref, b1_ref,             # (1, E, F)  bf16, (1, 1, F)  f32
    w2_ref, b2_ref,             # (1, F, E)  bf16, (1, 1, E)  f32
    ln2_w_ref, ln2_b_ref,       # (1, 1, E)  f32
    o_ref,                      # (B*S, E)   output (written at last layer)
    act_ref,                    # VMEM scratch (B*S, E) f32, persists across layers
    *, batch, seq, nhead,
):
    layer = pl.program_id(0)

    @pl.when(layer == 0)
    def _():
        act_ref[...] = x_ref[...].astype(jnp.float32)

    x = act_ref[...]                               # (B*S, E) f32
    E = x.shape[-1]
    Dh = E // nhead
    scale = 1.0 / (float(Dh) ** 0.5)

    # --- self attention (nn.MultiheadAttention, attn_mask=None) ---
    # QKV projection: bf16 MXU matmul, f32 accumulation (weights pre-transposed).
    qkv = jnp.dot(x.astype(jnp.bfloat16), w_in_ref[0],
                  preferred_element_type=jnp.float32) + b_in_ref[0]   # (B*S, 3E) f32
    q = (qkv[:, :E] * scale).astype(jnp.bfloat16)   # fold 1/sqrt(Dh) into Q
    k = qkv[:, E:2 * E].astype(jnp.bfloat16)
    v = qkv[:, 2 * E:].astype(jnp.bfloat16)

    # Attention per (batch element, head) with static slices — no transposes.
    ctx_rows = []
    for b in range(batch):
        rows = slice(b * seq, (b + 1) * seq)
        qb, kb, vb = q[rows, :], k[rows, :], v[rows, :]               # (S, E) bf16
        head_ctx = []
        for h in range(nhead):
            cols = slice(h * Dh, (h + 1) * Dh)
            qh = qb[:, cols]                        # (S, Dh) bf16
            kh = kb[:, cols]
            vh = vb[:, cols]
            # scores = qh @ kh^T via dot_general (contract last dims, no .T relayout)
            s = jax.lax.dot_general(
                qh, kh, (((1,), (1,)), ((), ())),
                preferred_element_type=jnp.float32)                   # (S, S) f32
            s = s - jnp.max(s, axis=-1, keepdims=True)
            p = jnp.exp(s)
            denom = jnp.sum(p, axis=-1, keepdims=True)
            p = p * pl.reciprocal(denom, approx=True)
            head_ctx.append(
                jnp.dot(p.astype(jnp.bfloat16), vh,
                        preferred_element_type=jnp.float32))          # (S, Dh) f32
        ctx_rows.append(jnp.concatenate(head_ctx, axis=-1))           # (S, E)
    ctx = jnp.concatenate(ctx_rows, axis=0)                           # (B*S, E) f32

    attn_out = jnp.dot(ctx.astype(jnp.bfloat16), w_out_ref[0],
                       preferred_element_type=jnp.float32) + b_out_ref[0]

    # residual + norm1 (dropout = identity in eval)
    x1 = _layernorm(x + attn_out, ln1_w_ref[0], ln1_b_ref[0])

    # --- feed forward: Linear -> ReLU -> Linear ---
    h1 = jnp.dot(x1.astype(jnp.bfloat16), w1_ref[0],
                 preferred_element_type=jnp.float32) + b1_ref[0]
    h1 = jnp.maximum(h1, 0.0)
    ff = jnp.dot(h1.astype(jnp.bfloat16), w2_ref[0],
                 preferred_element_type=jnp.float32) + b2_ref[0]

    # residual + norm2 (dropout = identity in eval)
    x2 = _layernorm(x1 + ff, ln2_w_ref[0], ln2_b_ref[0])

    act_ref[...] = x2

    @pl.when(layer == pl.num_programs(0) - 1)
    def _():
        o_ref[...] = act_ref[...].astype(o_ref.dtype)


def transformer_encoder(x_sbe, stacked_params, nhead):
    """x_sbe: (S, B, E) — PyTorch batch_first=False layout.

    stacked_params: tuple of 12 arrays, each with a leading num_layers axis.
    """
    S, B, E = x_sbe.shape
    L = stacked_params[0].shape[0]

    # Single host-side transpose + flatten to a (B*S, E) row slab.
    x = jnp.transpose(x_sbe, (1, 0, 2)).reshape(B * S, E)

    kernel = functools.partial(_encoder_stack_kernel,
                               batch=B, seq=S, nhead=nhead)

    def layer_spec(p):
        return pl.BlockSpec((1,) + p.shape[1:], lambda l: (l, 0, 0))

    param_specs = [layer_spec(p) for p in stacked_params]

    out = pl.pallas_call(
        kernel,
        out_shape=jax.ShapeDtypeStruct((B * S, E), x_sbe.dtype),
        grid=(L,),
        in_specs=[pl.BlockSpec((B * S, E), lambda l: (0, 0))] + param_specs,
        out_specs=pl.BlockSpec((B * S, E), lambda l: (0, 0)),
        scratch_shapes=[pltpu.VMEM((B * S, E), jnp.float32)],
        compiler_params=pltpu.CompilerParams(
            dimension_semantics=("arbitrary",)),
    )(x, *stacked_params)

    return out.reshape(B, S, E).transpose(1, 0, 2)      # back to (S, B, E)


def init_stacked_params(key, num_layers, d_model, nhead, dim_feedforward):
    """Per-layer params, pre-transposed to x @ W layout, stacked on a layer axis.

    Matmul weights stored bf16 (MXU-native); biases / LayerNorm params f32.
    """
    std = 0.02
    keys = jax.random.split(key, num_layers)
    per_layer = []
    for lk in keys:
        ks = jax.random.split(lk, 4)
        w_in = (jax.random.normal(ks[0], (d_model, 3 * d_model), jnp.float32)
                * std).astype(jnp.bfloat16)
        b_in = jnp.zeros((1, 3 * d_model), jnp.float32)
        w_out = (jax.random.normal(ks[1], (d_model, d_model), jnp.float32)
                 * std).astype(jnp.bfloat16)
        b_out = jnp.zeros((1, d_model), jnp.float32)
        ln1_w = jnp.ones((1, d_model), jnp.float32)
        ln1_b = jnp.zeros((1, d_model), jnp.float32)
        w1 = (jax.random.normal(ks[2], (d_model, dim_feedforward), jnp.float32)
              * std).astype(jnp.bfloat16)
        b1 = jnp.zeros((1, dim_feedforward), jnp.float32)
        w2 = (jax.random.normal(ks[3], (dim_feedforward, d_model), jnp.float32)
              * std).astype(jnp.bfloat16)
        b2 = jnp.zeros((1, d_model), jnp.float32)
        ln2_w = jnp.ones((1, d_model), jnp.float32)
        ln2_b = jnp.zeros((1, d_model), jnp.float32)
        per_layer.append((w_in, b_in, w_out, b_out, ln1_w, ln1_b,
                          w1, b1, w2, b2, ln2_w, ln2_b))
    return tuple(jnp.stack(ps, axis=0) for ps in zip(*per_layer))


def _encoder_ref(x_sbe, stacked_params, nhead):
    """Pure-JAX f32 reference (same math as PyTorch forward in eval mode)."""
    S, B, E = x_sbe.shape
    (w_in, b_in, w_out, b_out, ln1_w, ln1_b,
     w1, b1, w2, b2, ln2_w, ln2_b) = stacked_params
    L = w_in.shape[0]
    Dh = E // nhead
    scale = 1.0 / (float(Dh) ** 0.5)

    x = jnp.transpose(x_sbe, (1, 0, 2)).reshape(B * S, E).astype(jnp.float32)
    for l in range(L):
        qkv = x @ w_in[l].astype(jnp.float32) + b_in[l]
        q = (qkv[:, :E] * scale).reshape(B, S, nhead, Dh)
        k = qkv[:, E:2 * E].reshape(B, S, nhead, Dh)
        v = qkv[:, 2 * E:].reshape(B, S, nhead, Dh)
        s = jnp.einsum('bqhd,bkhd->bhqk', q, k)
        p = jax.nn.softmax(s, axis=-1)
        ctx = jnp.einsum('bhqk,bkhd->bqhd', p, v).reshape(B * S, E)
        attn = ctx @ w_out[l].astype(jnp.float32) + b_out[l]
        x = _layernorm(x + attn, ln1_w[l], ln1_b[l])
        h = jnp.maximum(x @ w1[l].astype(jnp.float32) + b1[l], 0.0)
        ff = h @ w2[l].astype(jnp.float32) + b2[l]
        x = _layernorm(x + ff, ln2_w[l], ln2_b[l])
    return x.reshape(B, S, E).transpose(1, 0, 2)


if __name__ == "__main__":
    num_layers = 2
    d_model = 32
    nhead = 4
    dim_feedforward = 64
    seq = 8
    batch = 2

    key = jax.random.PRNGKey(0)
    kx, kp = jax.random.split(key)
    x = jax.random.normal(kx, (seq, batch, d_model), jnp.float32)

    stacked_params = init_stacked_params(kp, num_layers, d_model, nhead,
                                         dim_feedforward)

    out = transformer_encoder(x, stacked_params, nhead)
    out = jax.block_until_ready(out)
    assert out.shape == (seq, batch, d_model)
    assert bool(jnp.all(jnp.isfinite(out)))

    # Correctness check against a pure-JAX f32 reference (bf16 MXU + approx
    # reciprocal tolerance).
    ref = _encoder_ref(x, stacked_params, nhead)
    max_err = float(jnp.max(jnp.abs(out - ref)))
    assert max_err < 1e-1, f"max abs err vs reference: {max_err}"

    print("KERNEL_OK")
</pallas_src>

<mosaic_0001>
module attributes {stable_mosaic.version = 11 : i64} {
  func.func @_encoder_stack_kernel(%arg0: i32, %arg1: memref<16x32xf32, #tpu.memory_space<vmem>>, %arg2: memref<1x32x96xbf16, #tpu.memory_space<vmem>>, %arg3: memref<1x1x96xf32, #tpu.memory_space<vmem>>, %arg4: memref<1x32x32xbf16, #tpu.memory_space<vmem>>, %arg5: memref<1x1x32xf32, #tpu.memory_space<vmem>>, %arg6: memref<1x1x32xf32, #tpu.memory_space<vmem>>, %arg7: memref<1x1x32xf32, #tpu.memory_space<vmem>>, %arg8: memref<1x32x64xbf16, #tpu.memory_space<vmem>>, %arg9: memref<1x1x64xf32, #tpu.memory_space<vmem>>, %arg10: memref<1x64x32xbf16, #tpu.memory_space<vmem>>, %arg11: memref<1x1x32xf32, #tpu.memory_space<vmem>>, %arg12: memref<1x1x32xf32, #tpu.memory_space<vmem>>, %arg13: memref<1x1x32xf32, #tpu.memory_space<vmem>>, %arg14: memref<16x32xf32, #tpu.memory_space<vmem>>, %arg15: memref<16x32xf32, #tpu.memory_space<vmem>>) attributes {dimension_semantics = [#tpu.dimension_semantics<arbitrary>], iteration_bounds = array<i64: 2>, scalar_prefetch = 0 : i64, scratch_operands = 1 : i64, tpu.core_type = #tpu.core_type<tc>, window_params = [{pipeline_mode = #tpu.pipeline_mode<synchronous>, transform_indices = @transform_0, window_bounds = array<i64: 16, 32>}, {transform_indices = @transform_1, window_bounds = array<i64: 1, 32, 96>}, {transform_indices = @transform_2, window_bounds = array<i64: 1, 1, 96>}, {transform_indices = @transform_3, window_bounds = array<i64: 1, 32, 32>}, {transform_indices = @transform_4, window_bounds = array<i64: 1, 1, 32>}, {transform_indices = @transform_5, window_bounds = array<i64: 1, 1, 32>}, {transform_indices = @transform_6, window_bounds = array<i64: 1, 1, 32>}, {transform_indices = @transform_7, window_bounds = array<i64: 1, 32, 64>}, {transform_indices = @transform_8, window_bounds = array<i64: 1, 1, 64>}, {transform_indices = @transform_9, window_bounds = array<i64: 1, 64, 32>}, {transform_indices = @transform_10, window_bounds = array<i64: 1, 1, 32>}, {transform_indices = @transform_11, window_bounds = array<i64: 1, 1, 32>}, {transform_indices = @transform_12, window_bounds = array<i64: 1, 1, 32>}, {pipeline_mode = #tpu.pipeline_mode<synchronous>, transform_indices = @transform_13, window_bounds = array<i64: 16, 32>}]} {
    %c0_i32 = arith.constant 0 : i32
    %0 = arith.cmpi eq, %arg0, %c0_i32 : i32
    %1 = arith.extui %0 : i1 to i32
    %c0_i32_0 = arith.constant 0 : i32
    %2 = arith.cmpi ne, %1, %c0_i32_0 : i32
    scf.if %2 {
      %c0_88 = arith.constant 0 : index
      %c0_89 = arith.constant 0 : index
      %241 = vector.load %arg1[%c0_88, %c0_89] : memref<16x32xf32, #tpu.memory_space<vmem>>, vector<16x32xf32>
      %c0_90 = arith.constant 0 : index
      %c0_91 = arith.constant 0 : index
      %242 = vector.load %arg15[%c0_90, %c0_91] : memref<16x32xf32, #tpu.memory_space<vmem>>, vector<16x32xf32>
      tpu.vector_store %arg15[%c0_90, %c0_91], %241 {strides = array<i32>} : memref<16x32xf32, #tpu.memory_space<vmem>>, vector<16x32xf32>,
    } else {
    }
    %c0 = arith.constant 0 : index
    %c0_1 = arith.constant 0 : index
    %3 = vector.load %arg15[%c0, %c0_1] : memref<16x32xf32, #tpu.memory_space<vmem>>, vector<16x32xf32>
    %4 = arith.truncf %3 : vector<16x32xf32> to vector<16x32xbf16>
    %c0_2 = arith.constant 0 : index
    %c0_3 = arith.constant 0 : index
    %c0_4 = arith.constant 0 : index
    %5 = vector.load %arg2[%c0_2, %c0_3, %c0_4] : memref<1x32x96xbf16, #tpu.memory_space<vmem>>, vector<1x32x96xbf16>
    %6 = vector.shape_cast %5 : vector<1x32x96xbf16> to vector<32x96xbf16>
    %cst = arith.constant dense<0.000000e+00> : vector<16x96xf32>
    %7 = tpu.matmul %4, %6, %cst {dimension_numbers = #tpu.dot_dimension_numbers<[1], [0], [0], [1], [0, 0, 1, 1], [], []>} : vector<16x32xbf16>, vector<32x96xbf16>, vector<16x96xf32> -> vector<16x96xf32>
    %c0_5 = arith.constant 0 : index
    %c0_6 = arith.constant 0 : index
    %c0_7 = arith.constant 0 : index
    %8 = vector.load %arg3[%c0_5, %c0_6, %c0_7] : memref<1x1x96xf32, #tpu.memory_space<vmem>>, vector<1x1x96xf32>
    %9 = vector.shape_cast %8 : vector<1x1x96xf32> to vector<1x96xf32>
    %10 = vector.broadcast %9 : vector<1x96xf32> to vector<16x96xf32>
    %11 = arith.addf %7, %10 : vector<16x96xf32>
    %12 = vector.extract_strided_slice %11 {offsets = [0, 0], sizes = [16, 32], strides = [1, 1]} : vector<16x96xf32> to vector<16x32xf32>
    %cst_8 = arith.constant 0.353553385 : f32
    %13 = vector.broadcast %cst_8 : f32 to vector<16x32xf32>
    %14 = arith.mulf %12, %13 : vector<16x32xf32>
    %15 = arith.truncf %14 : vector<16x32xf32> to vector<16x32xbf16>
    %16 = vector.extract_strided_slice %11 {offsets = [0, 32], sizes = [16, 32], strides = [1, 1]} : vector<16x96xf32> to vector<16x32xf32>
    %17 = arith.truncf %16 : vector<16x32xf32> to vector<16x32xbf16>
    %18 = vector.extract_strided_slice %11 {offsets = [0, 64], sizes = [16, 32], strides = [1, 1]} : vector<16x96xf32> to vector<16x32xf32>
    %19 = arith.truncf %18 : vector<16x32xf32> to vector<16x32xbf16>
    %20 = vector.extract_strided_slice %15 {offsets = [0, 0], sizes = [8, 32], strides = [1, 1]} : vector<16x32xbf16> to vector<8x32xbf16>
    %21 = vector.extract_strided_slice %17 {offsets = [0, 0], sizes = [8, 32], strides = [1, 1]} : vector<16x32xbf16> to vector<8x32xbf16>
    %22 = vector.extract_strided_slice %19 {offsets = [0, 0], sizes = [8, 32], strides = [1, 1]} : vector<16x32xbf16> to vector<8x32xbf16>
    %23 = vector.extract_strided_slice %20 {offsets = [0, 0], sizes = [8, 8], strides = [1, 1]} : vector<8x32xbf16> to vector<8x8xbf16>
    %24 = vector.extract_strided_slice %21 {offsets = [0, 0], sizes = [8, 8], strides = [1, 1]} : vector<8x32xbf16> to vector<8x8xbf16>
    %25 = vector.extract_strided_slice %22 {offsets = [0, 0], sizes = [8, 8], strides = [1, 1]} : vector<8x32xbf16> to vector<8x8xbf16>
    %cst_9 = arith.constant dense<0.000000e+00> : vector<8x8xf32>
    %26 = tpu.matmul %23, %24, %cst_9 {dimension_numbers = #tpu.dot_dimension_numbers<[1], [1], [0], [0], [0, 0, 1, 0], [], []>} : vector<8x8xbf16>, vector<8x8xbf16>, vector<8x8xf32> -> vector<8x8xf32>
    %cst_10 = arith.constant dense<0xFF800000> : vector<8xf32>
    %27 = vector.multi_reduction <maximumf>, %26, %cst_10 [1] : vector<8x8xf32> to vector<8xf32>
    %28 = vector.shape_cast %27 : vector<8xf32> to vector<8x1xf32>
    %29 = vector.broadcast %28 : vector<8x1xf32> to vector<8x8xf32>
    %30 = arith.subf %26, %29 : vector<8x8xf32>
    %31 = math.exp %30 : vector<8x8xf32>
    %cst_11 = arith.constant dense<0.000000e+00> : vector<8xf32>
    %32 = vector.multi_reduction <add>, %31, %cst_11 [1] : vector<8x8xf32> to vector<8xf32>
    %33 = vector.shape_cast %32 : vector<8xf32> to vector<8x1xf32>
    %34 = tpu.reciprocal %33 {approx = true} : vector<8x1xf32> -> vector<8x1xf32>
    %35 = vector.broadcast %34 : vector<8x1xf32> to vector<8x8xf32>
    %36 = arith.mulf %31, %35 : vector<8x8xf32>
    %37 = arith.truncf %36 : vector<8x8xf32> to vector<8x8xbf16>
    %cst_12 = arith.constant dense<0.000000e+00> : vector<8x8xf32>
    %38 = tpu.matmul %37, %25, %cst_12 {dimension_numbers = #tpu.dot_dimension_numbers<[1], [0], [0], [1], [0, 0, 1, 1], [], []>} : vector<8x8xbf16>, vector<8x8xbf16>, vector<8x8xf32> -> vector<8x8xf32>
    %39 = vector.extract_strided_slice %20 {offsets = [0, 8], sizes = [8, 8], strides = [1, 1]} : vector<8x32xbf16> to vector<8x8xbf16>
    %40 = vector.extract_strided_slice %21 {offsets = [0, 8], sizes = [8, 8], strides = [1, 1]} : vector<8x32xbf16> to vector<8x8xbf16>
    %41 = vector.extract_strided_slice %22 {offsets = [0, 8], sizes = [8, 8], strides = [1, 1]} : vector<8x32xbf16> to vector<8x8xbf16>
    %cst_13 = arith.constant dense<0.000000e+00> : vector<8x8xf32>
    %42 = tpu.matmul %39, %40, %cst_13 {dimension_numbers = #tpu.dot_dimension_numbers<[1], [1], [0], [0], [0, 0, 1, 0], [], []>} : vector<8x8xbf16>, vector<8x8xbf16>, vector<8x8xf32> -> vector<8x8xf32>
    %cst_14 = arith.constant dense<0xFF800000> : vector<8xf32>
    %43 = vector.multi_reduction <maximumf>, %42, %cst_14 [1] : vector<8x8xf32> to vector<8xf32>
    %44 = vector.shape_cast %43 : vector<8xf32> to vector<8x1xf32>
    %45 = vector.broadcast %44 : vector<8x1xf32> to vector<8x8xf32>
    %46 = arith.subf %42, %45 : vector<8x8xf32>
    %47 = math.exp %46 : vector<8x8xf32>
    %cst_15 = arith.constant dense<0.000000e+00> : vector<8xf32>
    %48 = vector.multi_reduction <add>, %47, %cst_15 [1] : vector<8x8xf32> to vector<8xf32>
    %49 = vector.shape_cast %48 : vector<8xf32> to vector<8x1xf32>
    %50 = tpu.reciprocal %49 {approx = true} : vector<8x1xf32> -> vector<8x1xf32>
    %51 = vector.broadcast %50 : vector<8x1xf32> to vector<8x8xf32>
    %52 = arith.mulf %47, %51 : vector<8x8xf32>
    %53 = arith.truncf %52 : vector<8x8xf32> to vector<8x8xbf16>
    %cst_16 = arith.constant dense<0.000000e+00> : vector<8x8xf32>
    %54 = tpu.matmul %53, %41, %cst_16 {dimension_numbers = #tpu.dot_dimension_numbers<[1], [0], [0], [1], [0, 0, 1, 1], [], []>} : vector<8x8xbf16>, vector<8x8xbf16>, vector<8x8xf32> -> vector<8x8xf32>
    %55 = vector.extract_strided_slice %20 {offsets = [0, 16], sizes = [8, 8], strides = [1, 1]} : vector<8x32xbf16> to vector<8x8xbf16>
    %56 = vector.extract_strided_slice %21 {offsets = [0, 16], sizes = [8, 8], strides = [1, 1]} : vector<8x32xbf16> to vector<8x8xbf16>
    %57 = vector.extract_strided_slice %22 {offsets = [0, 16], sizes = [8, 8], strides = [1, 1]} : vector<8x32xbf16> to vector<8x8xbf16>
    %cst_17 = arith.constant dense<0.000000e+00> : vector<8x8xf32>
    %58 = tpu.matmul %55, %56, %cst_17 {dimension_numbers = #tpu.dot_dimension_numbers<[1], [1], [0], [0], [0, 0, 1, 0], [], []>} : vector<8x8xbf16>, vector<8x8xbf16>, vector<8x8xf32> -> vector<8x8xf32>
    %cst_18 = arith.constant dense<0xFF800000> : vector<8xf32>
    %59 = vector.multi_reduction <maximumf>, %58, %cst_18 [1] : vector<8x8xf32> to vector<8xf32>
    %60 = vector.shape_cast %59 : vector<8xf32> to vector<8x1xf32>
    %61 = vector.broadcast %60 : vector<8x1xf32> to vector<8x8xf32>
    %62 = arith.subf %58, %61 : vector<8x8xf32>
    %63 = math.exp %62 : vector<8x8xf32>
    %cst_19 = arith.constant dense<0.000000e+00> : vector<8xf32>
    %64 = vector.multi_reduction <add>, %63, %cst_19 [1] : vector<8x8xf32> to vector<8xf32>
    %65 = vector.shape_cast %64 : vector<8xf32> to vector<8x1xf32>
    %66 = tpu.reciprocal %65 {approx = true} : vector<8x1xf32> -> vector<8x1xf32>
    %67 = vector.broadcast %66 : vector<8x1xf32> to vector<8x8xf32>
    %68 = arith.mulf %63, %67 : vector<8x8xf32>
    %69 = arith.truncf %68 : vector<8x8xf32> to vector<8x8xbf16>
    %cst_20 = arith.constant dense<0.000000e+00> : vector<8x8xf32>
    %70 = tpu.matmul %69, %57, %cst_20 {dimension_numbers = #tpu.dot_dimension_numbers<[1], [0], [0], [1], [0, 0, 1, 1], [], []>} : vector<8x8xbf16>, vector<8x8xbf16>, vector<8x8xf32> -> vector<8x8xf32>
    %71 = vector.extract_strided_slice %20 {offsets = [0, 24], sizes = [8, 8], strides = [1, 1]} : vector<8x32xbf16> to vector<8x8xbf16>
    %72 = vector.extract_strided_slice %21 {offsets = [0, 24], sizes = [8, 8], strides = [1, 1]} : vector<8x32xbf16> to vector<8x8xbf16>
    %73 = vector.extract_strided_slice %22 {offsets = [0, 24], sizes = [8, 8], strides = [1, 1]} : vector<8x32xbf16> to vector<8x8xbf16>
    %cst_21 = arith.constant dense<0.000000e+00> : vector<8x8xf32>
    %74 = tpu.matmul %71, %72, %cst_21 {dimension_numbers = #tpu.dot_dimension_numbers<[1], [1], [0], [0], [0, 0, 1, 0], [], []>} : vector<8x8xbf16>, vector<8x8xbf16>, vector<8x8xf32> -> vector<8x8xf32>
    %cst_22 = arith.constant dense<0xFF800000> : vector<8xf32>
    %75 = vector.multi_reduction <maximumf>, %74, %cst_22 [1] : vector<8x8xf32> to vector<8xf32>
    %76 = vector.shape_cast %75 : vector<8xf32> to vector<8x1xf32>
    %77 = vector.broadcast %76 : vector<8x1xf32> to vector<8x8xf32>
    %78 = arith.subf %74, %77 : vector<8x8xf32>
    %79 = math.exp %78 : vector<8x8xf32>
    %cst_23 = arith.constant dense<0.000000e+00> : vector<8xf32>
    %80 = vector.multi_reduction <add>, %79, %cst_23 [1] : vector<8x8xf32> to vector<8xf32>
    %81 = vector.shape_cast %80 : vector<8xf32> to vector<8x1xf32>
    %82 = tpu.reciprocal %81 {approx = true} : vector<8x1xf32> -> vector<8x1xf32>
    %83 = vector.broadcast %82 : vector<8x1xf32> to vector<8x8xf32>
    %84 = arith.mulf %79, %83 : vector<8x8xf32>
    %85 = arith.truncf %84 : vector<8x8xf32> to vector<8x8xbf16>
    %cst_24 = arith.constant dense<0.000000e+00> : vector<8x8xf32>
    %86 = tpu.matmul %85, %73, %cst_24 {dimension_numbers = #tpu.dot_dimension_numbers<[1], [0], [0], [1], [0, 0, 1, 1], [], []>} : vector<8x8xbf16>, vector<8x8xbf16>, vector<8x8xf32> -> vector<8x8xf32>
    %87 = tpu.concatenate %38, %54, %70, %86 in 1 : vector<8x8xf32>, vector<8x8xf32>, vector<8x8xf32>, vector<8x8xf32> -> vector<8x32xf32>
    %88 = vector.extract_strided_slice %15 {offsets = [8, 0], sizes = [8, 32], strides = [1, 1]} : vector<16x32xbf16> to vector<8x32xbf16>
    %89 = vector.extract_strided_slice %17 {offsets = [8, 0], sizes = [8, 32], strides = [1, 1]} : vector<16x32xbf16> to vector<8x32xbf16>
    %90 = vector.extract_strided_slice %19 {offsets = [8, 0], sizes = [8, 32], strides = [1, 1]} : vector<16x32xbf16> to vector<8x32xbf16>
    %91 = vector.extract_strided_slice %88 {offsets = [0, 0], sizes = [8, 8], strides = [1, 1]} : vector<8x32xbf16> to vector<8x8xbf16>
    %92 = vector.extract_strided_slice %89 {offsets = [0, 0], sizes = [8, 8], strides = [1, 1]} : vector<8x32xbf16> to vector<8x8xbf16>
    %93 = vector.extract_strided_slice %90 {offsets = [0, 0], sizes = [8, 8], strides = [1, 1]} : vector<8x32xbf16> to vector<8x8xbf16>
    %cst_25 = arith.constant dense<0.000000e+00> : vector<8x8xf32>
    %94 = tpu.matmul %91, %92, %cst_25 {dimension_numbers = #tpu.dot_dimension_numbers<[1], [1], [0], [0], [0, 0, 1, 0], [], []>} : vector<8x8xbf16>, vector<8x8xbf16>, vector<8x8xf32> -> vector<8x8xf32>
    %cst_26 = arith.constant dense<0xFF800000> : vector<8xf32>
    %95 = vector.multi_reduction <maximumf>, %94, %cst_26 [1] : vector<8x8xf32> to vector<8xf32>
    %96 = vector.shape_cast %95 : vector<8xf32> to vector<8x1xf32>
    %97 = vector.broadcast %96 : vector<8x1xf32> to vector<8x8xf32>
    %98 = arith.subf %94, %97 : vector<8x8xf32>
    %99 = math.exp %98 : vector<8x8xf32>
    %cst_27 = arith.constant dense<0.000000e+00> : vector<8xf32>
    %100 = vector.multi_reduction <add>, %99, %cst_27 [1] : vector<8x8xf32> to vector<8xf32>
    %101 = vector.shape_cast %100 : vector<8xf32> to vector<8x1xf32>
    %102 = tpu.reciprocal %101 {approx = true} : vector<8x1xf32> -> vector<8x1xf32>
    %103 = vector.broadcast %102 : vector<8x1xf32> to vector<8x8xf32>
    %104 = arith.mulf %99, %103 : vector<8x8xf32>
    %105 = arith.truncf %104 : vector<8x8xf32> to vector<8x8xbf16>
    %cst_28 = arith.constant dense<0.000000e+00> : vector<8x8xf32>
    %106 = tpu.matmul %105, %93, %cst_28 {dimension_numbers = #tpu.dot_dimension_numbers<[1], [0], [0], [1], [0, 0, 1, 1], [], []>} : vector<8x8xbf16>, vector<8x8xbf16>, vector<8x8xf32> -> vector<8x8xf32>
    %107 = vector.extract_strided_slice %88 {offsets = [0, 8], sizes = [8, 8], strides = [1, 1]} : vector<8x32xbf16> to vector<8x8xbf16>
    %108 = vector.extract_strided_slice %89 {offsets = [0, 8], sizes = [8, 8], strides = [1, 1]} : vector<8x32xbf16> to vector<8x8xbf16>
    %109 = vector.extract_strided_slice %90 {offsets = [0, 8], sizes = [8, 8], strides = [1, 1]} : vector<8x32xbf16> to vector<8x8xbf16>
    %cst_29 = arith.constant dense<0.000000e+00> : vector<8x8xf32>
    %110 = tpu.matmul %107, %108, %cst_29 {dimension_numbers = #tpu.dot_dimension_numbers<[1], [1], [0], [0], [0, 0, 1, 0], [], []>} : vector<8x8xbf16>, vector<8x8xbf16>, vector<8x8xf32> -> vector<8x8xf32>
    %cst_30 = arith.constant dense<0xFF800000> : vector<8xf32>
    %111 = vector.multi_reduction <maximumf>, %110, %cst_30 [1] : vector<8x8xf32> to vector<8xf32>
    %112 = vector.shape_cast %111 : vector<8xf32> to vector<8x1xf32>
    %113 = vector.broadcast %112 : vector<8x1xf32> to vector<8x8xf32>
    %114 = arith.subf %110, %113 : vector<8x8xf32>
    %115 = math.exp %114 : vector<8x8xf32>
    %cst_31 = arith.constant dense<0.000000e+00> : vector<8xf32>
    %116 = vector.multi_reduction <add>, %115, %cst_31 [1] : vector<8x8xf32> to vector<8xf32>
    %117 = vector.shape_cast %116 : vector<8xf32> to vector<8x1xf32>
    %118 = tpu.reciprocal %117 {approx = true} : vector<8x1xf32> -> vector<8x1xf32>
    %119 = vector.broadcast %118 : vector<8x1xf32> to vector<8x8xf32>
    %120 = arith.mulf %115, %119 : vector<8x8xf32>
    %121 = arith.truncf %120 : vector<8x8xf32> to vector<8x8xbf16>
    %cst_32 = arith.constant dense<0.000000e+00> : vector<8x8xf32>
    %122 = tpu.matmul %121, %109, %cst_32 {dimension_numbers = #tpu.dot_dimension_numbers<[1], [0], [0], [1], [0, 0, 1, 1], [], []>} : vector<8x8xbf16>, vector<8x8xbf16>, vector<8x8xf32> -> vector<8x8xf32>
    %123 = vector.extract_strided_slice %88 {offsets = [0, 16], sizes = [8, 8], strides = [1, 1]} : vector<8x32xbf16> to vector<8x8xbf16>
    %124 = vector.extract_strided_slice %89 {offsets = [0, 16], sizes = [8, 8], strides = [1, 1]} : vector<8x32xbf16> to vector<8x8xbf16>
    %125 = vector.extract_strided_slice %90 {offsets = [0, 16], sizes = [8, 8], strides = [1, 1]} : vector<8x32xbf16> to vector<8x8xbf16>
    %cst_33 = arith.constant dense<0.000000e+00> : vector<8x8xf32>
    %126 = tpu.matmul %123, %124, %cst_33 {dimension_numbers = #tpu.dot_dimension_numbers<[1], [1], [0], [0], [0, 0, 1, 0], [], []>} : vector<8x8xbf16>, vector<8x8xbf16>, vector<8x8xf32> -> vector<8x8xf32>
    %cst_34 = arith.constant dense<0xFF800000> : vector<8xf32>
    %127 = vector.multi_reduction <maximumf>, %126, %cst_34 [1] : vector<8x8xf32> to vector<8xf32>
    %128 = vector.shape_cast %127 : vector<8xf32> to vector<8x1xf32>
    %129 = vector.broadcast %128 : vector<8x1xf32> to vector<8x8xf32>
    %130 = arith.subf %126, %129 : vector<8x8xf32>
    %131 = math.exp %130 : vector<8x8xf32>
    %cst_35 = arith.constant dense<0.000000e+00> : vector<8xf32>
    %132 = vector.multi_reduction <add>, %131, %cst_35 [1] : vector<8x8xf32> to vector<8xf32>
    %133 = vector.shape_cast %132 : vector<8xf32> to vector<8x1xf32>
    %134 = tpu.reciprocal %133 {approx = true} : vector<8x1xf32> -> vector<8x1xf32>
    %135 = vector.broadcast %134 : vector<8x1xf32> to vector<8x8xf32>
    %136 = arith.mulf %131, %135 : vector<8x8xf32>
    %137 = arith.truncf %136 : vector<8x8xf32> to vector<8x8xbf16>
    %cst_36 = arith.constant dense<0.000000e+00> : vector<8x8xf32>
    %138 = tpu.matmul %137, %125, %cst_36 {dimension_numbers = #tpu.dot_dimension_numbers<[1], [0], [0], [1], [0, 0, 1, 1], [], []>} : vector<8x8xbf16>, vector<8x8xbf16>, vector<8x8xf32> -> vector<8x8xf32>
    %139 = vector.extract_strided_slice %88 {offsets = [0, 24], sizes = [8, 8], strides = [1, 1]} : vector<8x32xbf16> to vector<8x8xbf16>
    %140 = vector.extract_strided_slice %89 {offsets = [0, 24], sizes = [8, 8], strides = [1, 1]} : vector<8x32xbf16> to vector<8x8xbf16>
    %141 = vector.extract_strided_slice %90 {offsets = [0, 24], sizes = [8, 8], strides = [1, 1]} : vector<8x32xbf16> to vector<8x8xbf16>
    %cst_37 = arith.constant dense<0.000000e+00> : vector<8x8xf32>
    %142 = tpu.matmul %139, %140, %cst_37 {dimension_numbers = #tpu.dot_dimension_numbers<[1], [1], [0], [0], [0, 0, 1, 0], [], []>} : vector<8x8xbf16>, vector<8x8xbf16>, vector<8x8xf32> -> vector<8x8xf32>
    %cst_38 = arith.constant dense<0xFF800000> : vector<8xf32>
    %143 = vector.multi_reduction <maximumf>, %142, %cst_38 [1] : vector<8x8xf32> to vector<8xf32>
    %144 = vector.shape_cast %143 : vector<8xf32> to vector<8x1xf32>
    %145 = vector.broadcast %144 : vector<8x1xf32> to vector<8x8xf32>
    %146 = arith.subf %142, %145 : vector<8x8xf32>
    %147 = math.exp %146 : vector<8x8xf32>
    %cst_39 = arith.constant dense<0.000000e+00> : vector<8xf32>
    %148 = vector.multi_reduction <add>, %147, %cst_39 [1] : vector<8x8xf32> to vector<8xf32>
    %149 = vector.shape_cast %148 : vector<8xf32> to vector<8x1xf32>
    %150 = tpu.reciprocal %149 {approx = true} : vector<8x1xf32> -> vector<8x1xf32>
    %151 = vector.broadcast %150 : vector<8x1xf32> to vector<8x8xf32>
    %152 = arith.mulf %147, %151 : vector<8x8xf32>
    %153 = arith.truncf %152 : vector<8x8xf32> to vector<8x8xbf16>
    %cst_40 = arith.constant dense<0.000000e+00> : vector<8x8xf32>
    %154 = tpu.matmul %153, %141, %cst_40 {dimension_numbers = #tpu.dot_dimension_numbers<[1], [0], [0], [1], [0, 0, 1, 1], [], []>} : vector<8x8xbf16>, vector<8x8xbf16>, vector<8x8xf32> -> vector<8x8xf32>
    %155 = tpu.concatenate %106, %122, %138, %154 in 1 : vector<8x8xf32>, vector<8x8xf32>, vector<8x8xf32>, vector<8x8xf32> -> vector<8x32xf32>
    %156 = tpu.concatenate %87, %155 in 0 : vector<8x32xf32>, vector<8x32xf32> -> vector<16x32xf32>
    %157 = arith.truncf %156 : vector<16x32xf32> to vector<16x32xbf16>
    %c0_41 = arith.constant 0 : index
    %c0_42 = arith.constant 0 : index
    %c0_43 = arith.constant 0 : index
    %158 = vector.load %arg4[%c0_41, %c0_42, %c0_43] : memref<1x32x32xbf16, #tpu.memory_space<vmem>>, vector<1x32x32xbf16>
    %159 = vector.shape_cast %158 : vector<1x32x32xbf16> to vector<32x32xbf16>
    %cst_44 = arith.constant dense<0.000000e+00> : vector<16x32xf32>
    %160 = tpu.matmul %157, %159, %cst_44 {dimension_numbers = #tpu.dot_dimension_numbers<[1], [0], [0], [1], [0, 0, 1, 1], [], []>} : vector<16x32xbf16>, vector<32x32xbf16>, vector<16x32xf32> -> vector<16x32xf32>
    %c0_45 = arith.constant 0 : index
    %c0_46 = arith.constant 0 : index
    %c0_47 = arith.constant 0 : index
    %161 = vector.load %arg5[%c0_45, %c0_46, %c0_47] : memref<1x1x32xf32, #tpu.memory_space<vmem>>, vector<1x1x32xf32>
    %162 = vector.shape_cast %161 : vector<1x1x32xf32> to vector<1x32xf32>
    %163 = vector.broadcast %162 : vector<1x32xf32> to vector<16x32xf32>
    %164 = arith.addf %160, %163 : vector<16x32xf32>
    %165 = arith.addf %3, %164 : vector<16x32xf32>
    %c0_48 = arith.constant 0 : index
    %c0_49 = arith.constant 0 : index
    %c0_50 = arith.constant 0 : index
    %166 = vector.load %arg6[%c0_48, %c0_49, %c0_50] : memref<1x1x32xf32, #tpu.memory_space<vmem>>, vector<1x1x32xf32>
    %167 = vector.shape_cast %166 : vector<1x1x32xf32> to vector<1x32xf32>
    %c0_51 = arith.constant 0 : index
    %c0_52 = arith.constant 0 : index
    %c0_53 = arith.constant 0 : index
    %168 = vector.load %arg7[%c0_51, %c0_52, %c0_53] : memref<1x1x32xf32, #tpu.memory_space<vmem>>, vector<1x1x32xf32>
    %169 = vector.shape_cast %168 : vector<1x1x32xf32> to vector<1x32xf32>
    %cst_54 = arith.constant dense<0.000000e+00> : vector<16xf32>
    %170 = vector.multi_reduction <add>, %165, %cst_54 [1] : vector<16x32xf32> to vector<16xf32>
    %171 = vector.shape_cast %170 : vector<16xf32> to vector<16x1xf32>
    %cst_55 = arith.constant 3.200000e+01 : f32
    %172 = vector.broadcast %cst_55 : f32 to vector<16x1xf32>
    %173 = arith.divf %171, %172 : vector<16x1xf32>
    %174 = vector.broadcast %173 : vector<16x1xf32> to vector<16x32xf32>
    %175 = arith.subf %165, %174 : vector<16x32xf32>
    %176 = arith.mulf %175, %175 : vector<16x32xf32>
    %cst_56 = arith.constant dense<0.000000e+00> : vector<16xf32>
    %177 = vector.multi_reduction <add>, %176, %cst_56 [1] : vector<16x32xf32> to vector<16xf32>
    %178 = vector.shape_cast %177 : vector<16xf32> to vector<16x1xf32>
    %cst_57 = arith.constant 3.200000e+01 : f32
    %179 = vector.broadcast %cst_57 : f32 to vector<16x1xf32>
    %180 = arith.divf %178, %179 : vector<16x1xf32>
    %181 = vector.broadcast %173 : vector<16x1xf32> to vector<16x32xf32>
    %182 = arith.subf %165, %181 : vector<16x32xf32>
    %cst_58 = arith.constant 9.99999974E-6 : f32
    %183 = vector.broadcast %cst_58 : f32 to vector<16x1xf32>
    %184 = arith.addf %180, %183 : vector<16x1xf32>
    %185 = math.rsqrt %184 : vector<16x1xf32>
    %186 = vector.broadcast %185 : vector<16x1xf32> to vector<16x32xf32>
    %187 = arith.mulf %182, %186 : vector<16x32xf32>
    %188 = vector.broadcast %167 : vector<1x32xf32> to vector<16x32xf32>
    %189 = arith.mulf %187, %188 : vector<16x32xf32>
    %190 = vector.broadcast %169 : vector<1x32xf32> to vector<16x32xf32>
    %191 = arith.addf %189, %190 : vector<16x32xf32>
    %192 = arith.truncf %191 : vector<16x32xf32> to vector<16x32xbf16>
    %c0_59 = arith.constant 0 : index
    %c0_60 = arith.constant 0 : index
    %c0_61 = arith.constant 0 : index
    %193 = vector.load %arg8[%c0_59, %c0_60, %c0_61] : memref<1x32x64xbf16, #tpu.memory_space<vmem>>, vector<1x32x64xbf16>
    %194 = vector.shape_cast %193 : vector<1x32x64xbf16> to vector<32x64xbf16>
    %cst_62 = arith.constant dense<0.000000e+00> : vector<16x64xf32>
    %195 = tpu.matmul %192, %194, %cst_62 {dimension_numbers = #tpu.dot_dimension_numbers<[1], [0], [0], [1], [0, 0, 1, 1], [], []>} : vector<16x32xbf16>, vector<32x64xbf16>, vector<16x64xf32> -> vector<16x64xf32>
    %c0_63 = arith.constant 0 : index
    %c0_64 = arith.constant 0 : index
    %c0_65 = arith.constant 0 : index
    %196 = vector.load %arg9[%c0_63, %c0_64, %c0_65] : memref<1x1x64xf32, #tpu.memory_space<vmem>>, vector<1x1x64xf32>
    %197 = vector.shape_cast %196 : vector<1x1x64xf32> to vector<1x64xf32>
    %198 = vector.broadcast %197 : vector<1x64xf32> to vector<16x64xf32>
    %199 = arith.addf %195, %198 : vector<16x64xf32>
    %cst_66 = arith.constant 0.000000e+00 : f32
    %200 = vector.broadcast %cst_66 : f32 to vector<16x64xf32>
    %201 = arith.maximumf %199, %200 : vector<16x64xf32>
    %202 = arith.truncf %201 : vector<16x64xf32> to vector<16x64xbf16>
    %c0_67 = arith.constant 0 : index
    %c0_68 = arith.constant 0 : index
    %c0_69 = arith.constant 0 : index
    %203 = vector.load %arg10[%c0_67, %c0_68, %c0_69] : memref<1x64x32xbf16, #tpu.memory_space<vmem>>, vector<1x64x32xbf16>
    %204 = vector.shape_cast %203 : vector<1x64x32xbf16> to vector<64x32xbf16>
    %cst_70 = arith.constant dense<0.000000e+00> : vector<16x32xf32>
    %205 = tpu.matmul %202, %204, %cst_70 {dimension_numbers = #tpu.dot_dimension_numbers<[1], [0], [0], [1], [0, 0, 1, 1], [], []>} : vector<16x64xbf16>, vector<64x32xbf16>, vector<16x32xf32> -> vector<16x32xf32>
    %c0_71 = arith.constant 0 : index
    %c0_72 = arith.constant 0 : index
    %c0_73 = arith.constant 0 : index
    %206 = vector.load %arg11[%c0_71, %c0_72, %c0_73] : memref<1x1x32xf32, #tpu.memory_space<vmem>>, vector<1x1x32xf32>
    %207 = vector.shape_cast %206 : vector<1x1x32xf32> to vector<1x32xf32>
    %208 = vector.broadcast %207 : vector<1x32xf32> to vector<16x32xf32>
    %209 = arith.addf %205, %208 : vector<16x32xf32>
    %210 = arith.addf %191, %209 : vector<16x32xf32>
    %c0_74 = arith.constant 0 : index
    %c0_75 = arith.constant 0 : index
    %c0_76 = arith.constant 0 : index
    %211 = vector.load %arg12[%c0_74, %c0_75, %c0_76] : memref<1x1x32xf32, #tpu.memory_space<vmem>>, vector<1x1x32xf32>
    %212 = vector.shape_cast %211 : vector<1x1x32xf32> to vector<1x32xf32>
    %c0_77 = arith.constant 0 : index
    %c0_78 = arith.constant 0 : index
    %c0_79 = arith.constant 0 : index
    %213 = vector.load %arg13[%c0_77, %c0_78, %c0_79] : memref<1x1x32xf32, #tpu.memory_space<vmem>>, vector<1x1x32xf32>
    %214 = vector.shape_cast %213 : vector<1x1x32xf32> to vector<1x32xf32>
    %cst_80 = arith.constant dense<0.000000e+00> : vector<16xf32>
    %215 = vector.multi_reduction <add>, %210, %cst_80 [1] : vector<16x32xf32> to vector<16xf32>
    %216 = vector.shape_cast %215 : vector<16xf32> to vector<16x1xf32>
    %cst_81 = arith.constant 3.200000e+01 : f32
    %217 = vector.broadcast %cst_81 : f32 to vector<16x1xf32>
    %218 = arith.divf %216, %217 : vector<16x1xf32>
    %219 = vector.broadcast %218 : vector<16x1xf32> to vector<16x32xf32>
    %220 = arith.subf %210, %219 : vector<16x32xf32>
    %221 = arith.mulf %220, %220 : vector<16x32xf32>
    %cst_82 = arith.constant dense<0.000000e+00> : vector<16xf32>
    %222 = vector.multi_reduction <add>, %221, %cst_82 [1] : vector<16x32xf32> to vector<16xf32>
    %223 = vector.shape_cast %222 : vector<16xf32> to vector<16x1xf32>
    %cst_83 = arith.constant 3.200000e+01 : f32
    %224 = vector.broadcast %cst_83 : f32 to vector<16x1xf32>
    %225 = arith.divf %223, %224 : vector<16x1xf32>
    %226 = vector.broadcast %218 : vector<16x1xf32> to vector<16x32xf32>
    %227 = arith.subf %210, %226 : vector<16x32xf32>
    %cst_84 = arith.constant 9.99999974E-6 : f32
    %228 = vector.broadcast %cst_84 : f32 to vector<16x1xf32>
    %229 = arith.addf %225, %228 : vector<16x1xf32>
    %230 = math.rsqrt %229 : vector<16x1xf32>
    %231 = vector.broadcast %230 : vector<16x1xf32> to vector<16x32xf32>
    %232 = arith.mulf %227, %231 : vector<16x32xf32>
    %233 = vector.broadcast %212 : vector<1x32xf32> to vector<16x32xf32>
    %234 = arith.mulf %232, %233 : vector<16x32xf32>
    %235 = vector.broadcast %214 : vector<1x32xf32> to vector<16x32xf32>
    %236 = arith.addf %234, %235 : vector<16x32xf32>
    %c0_85 = arith.constant 0 : index
    %c0_86 = arith.constant 0 : index
    %237 = vector.load %arg15[%c0_85, %c0_86] : memref<16x32xf32, #tpu.memory_space<vmem>>, vector<16x32xf32>
    tpu.vector_store %arg15[%c0_85, %c0_86], %236 {strides = array<i32>} : memref<16x32xf32, #tpu.memory_space<vmem>>, vector<16x32xf32>,
    %c1_i32 = arith.constant 1 : i32
    %238 = arith.cmpi eq, %arg0, %c1_i32 : i32
    %239 = arith.extui %238 : i1 to i32
    %c0_i32_87 = arith.constant 0 : i32
    %240 = arith.cmpi ne, %239, %c0_i32_87 : i32
    scf.if %240 {
      %c0_88 = arith.constant 0 : index
      %c0_89 = arith.constant 0 : index
      %241 = vector.load %arg15[%c0_88, %c0_89] : memref<16x32xf32, #tpu.memory_space<vmem>>, vector<16x32xf32>
      %c0_90 = arith.constant 0 : index
      %c0_91 = arith.constant 0 : index
      %242 = vector.load %arg14[%c0_90, %c0_91] : memref<16x32xf32, #tpu.memory_space<vmem>>, vector<16x32xf32>
      tpu.vector_store %arg14[%c0_90, %c0_91], %241 {strides = array<i32>} : memref<16x32xf32, #tpu.memory_space<vmem>>, vector<16x32xf32>,
    } else {
    }
    return
  }
  func.func @transform_0(%arg0: i32) -> (i32, i32) {
    %c0_i32 = arith.constant 0 : i32
    %c0_i32_0 = arith.constant 0 : i32
    %c0_i32_1 = arith.constant 0 : i32
    return %c0_i32, %c0_i32_0 : i32, i32
  }
  func.func @transform_1(%arg0: i32) -> (i32, i32, i32) {
    %c0_i32 = arith.constant 0 : i32
    %c0_i32_0 = arith.constant 0 : i32
    %c0_i32_1 = arith.constant 0 : i32
    return %arg0, %c0_i32, %c0_i32_0 : i32, i32, i32
  }
  func.func @transform_2(%arg0: i32) -> (i32, i32, i32) {
    %c0_i32 = arith.constant 0 : i32
    %c0_i32_0 = arith.constant 0 : i32
    %c0_i32_1 = arith.constant 0 : i32
    return %arg0, %c0_i32, %c0_i32_0 : i32, i32, i32
  }
  func.func @transform_3(%arg0: i32) -> (i32, i32, i32) {
    %c0_i32 = arith.constant 0 : i32
    %c0_i32_0 = arith.constant 0 : i32
    %c0_i32_1 = arith.constant 0 : i32
    return %arg0, %c0_i32, %c0_i32_0 : i32, i32, i32
  }
  func.func @transform_4(%arg0: i32) -> (i32, i32, i32) {
    %c0_i32 = arith.constant 0 : i32
    %c0_i32_0 = arith.constant 0 : i32
    %c0_i32_1 = arith.constant 0 : i32
    return %arg0, %c0_i32, %c0_i32_0 : i32, i32, i32
  }
  func.func @transform_5(%arg0: i32) -> (i32, i32, i32) {
    %c0_i32 = arith.constant 0 : i32
    %c0_i32_0 = arith.constant 0 : i32
    %c0_i32_1 = arith.constant 0 : i32
    return %arg0, %c0_i32, %c0_i32_0 : i32, i32, i32
  }
  func.func @transform_6(%arg0: i32) -> (i32, i32, i32) {
    %c0_i32 = arith.constant 0 : i32
    %c0_i32_0 = arith.constant 0 : i32
    %c0_i32_1 = arith.constant 0 : i32
    return %arg0, %c0_i32, %c0_i32_0 : i32, i32, i32
  }
  func.func @transform_7(%arg0: i32) -> (i32, i32, i32) {
    %c0_i32 = arith.constant 0 : i32
    %c0_i32_0 = arith.constant 0 : i32
    %c0_i32_1 = arith.constant 0 : i32
    return %arg0, %c0_i32, %c0_i32_0 : i32, i32, i32
  }
  func.func @transform_8(%arg0: i32) -> (i32, i32, i32) {
    %c0_i32 = arith.constant 0 : i32
    %c0_i32_0 = arith.constant 0 : i32
    %c0_i32_1 = arith.constant 0 : i32
    return %arg0, %c0_i32, %c0_i32_0 : i32, i32, i32
  }
  func.func @transform_9(%arg0: i32) -> (i32, i32, i32) {
    %c0_i32 = arith.constant 0 : i32
    %c0_i32_0 = arith.constant 0 : i32
    %c0_i32_1 = arith.constant 0 : i32
    return %arg0, %c0_i32, %c0_i32_0 : i32, i32, i32
  }
  func.func @transform_10(%arg0: i32) -> (i32, i32, i32) {
    %c0_i32 = arith.constant 0 : i32
    %c0_i32_0 = arith.constant 0 : i32
    %c0_i32_1 = arith.constant 0 : i32
    return %arg0, %c0_i32, %c0_i32_0 : i32, i32, i32
  }
  func.func @transform_11(%arg0: i32) -> (i32, i32, i32) {
    %c0_i32 = arith.constant 0 : i32
    %c0_i32_0 = arith.constant 0 : i32
    %c0_i32_1 = arith.constant 0 : i32
    return %arg0, %c0_i32, %c0_i32_0 : i32, i32, i32
  }
  func.func @transform_12(%arg0: i32) -> (i32, i32, i32) {
    %c0_i32 = arith.constant 0 : i32
    %c0_i32_0 = arith.constant 0 : i32
    %c0_i32_1 = arith.constant 0 : i32
    return %arg0, %c0_i32, %c0_i32_0 : i32, i32, i32
  }
  func.func @transform_13(%arg0: i32) -> (i32, i32) {
    %c0_i32 = arith.constant 0 : i32
    %c0_i32_0 = arith.constant 0 : i32
    %c0_i32_1 = arith.constant 0 : i32
    return %c0_i32, %c0_i32_0 : i32, i32
  }
}

</mosaic_0001>

<llo_original>
// kernel: tpu_custom_call.1
$region0: #{tpu_custom_call.1}
  #allocation0 [shape = 'u32[]', space=smem, size = 0x4, offset = 0x4, fixed_abs, tag = 'smem constant byte address 0x4 - core index']
  #allocation1 [shape = 'u32[144,128]{1,0:T(1,128)}', space=vmem, size = 0x12000, scoped, tag = 'internal scratch']
  #allocation2 [shape = 'f32[16,32]{1,0:T(8,128)}', space=vmem, size = 0x2000, scoped, tag = 'scratch operand']
  %s0 = inlined_call_operand.hbm [shape: f32[16,32], index: 0, kind: input, shape index: {}]
  %s1 = inlined_call_operand.vmem [shape: bf16[2,32,96], index: 1, kind: input, shape index: {}]
  %s2 = inlined_call_operand.vmem [shape: f32[2,1,96], index: 2, kind: input, shape index: {}]
  %s3 = inlined_call_operand.vmem [shape: bf16[2,32,32], index: 3, kind: input, shape index: {}]
  %s4 = inlined_call_operand.hbm [shape: f32[2,1,32], index: 4, kind: input, shape index: {}]
  %s5 = inlined_call_operand.hbm [shape: f32[2,1,32], index: 5, kind: input, shape index: {}]
  %s6 = inlined_call_operand.hbm [shape: f32[2,1,32], index: 6, kind: input, shape index: {}]
  %s7 = inlined_call_operand.vmem [shape: bf16[2,32,64], index: 7, kind: input, shape index: {}]
  %s8 = inlined_call_operand.hbm [shape: f32[2,1,64], index: 8, kind: input, shape index: {}]
  %s9 = inlined_call_operand.vmem [shape: bf16[2,64,32], index: 9, kind: input, shape index: {}]
  %s10 = inlined_call_operand.vmem [shape: f32[2,1,32], index: 10, kind: input, shape index: {}]
  %s11 = inlined_call_operand.vmem [shape: f32[2,1,32], index: 11, kind: input, shape index: {}]
  %s12 = inlined_call_operand.vmem [shape: f32[2,1,32], index: 12, kind: input, shape index: {}]
  %s13 = inlined_call_operand.hbm [shape: f32[16,32], index: 13, kind: output, shape index: {}]
  %s14 = sld [smem:[#allocation0]]
  $region113: #{tpu_custom_call.1} parent=0
    _
  %s16 = ssub.s32 1, %s14
  %s17 = scalar_select 0, %s16, %s14
  $region1: #{tpu_custom_call.1} parent=0
    #allocation3 [shape = 'u8[8192]{0}', space=vmem, size = 0x2000, scoped, tag = 'input window, operand 0, single buffered']
    #allocation4 [shape = 's32[2]{0}', space=sflag, size = 0x8, scoped, tag = 'scoped memory for tpu_custom_call.1']
    #allocation5 [shape = 's32[2]{0}', space=sflag, size = 0x8, scoped, tag = 'scoped memory for tpu_custom_call.1']
    #allocation6 [shape = 'u8[1024]{0}', space=vmem, size = 0x400, scoped, tag = 'input window, operand 4']
    #allocation7 [shape = 's32[2]{0}', space=sflag, size = 0x8, scoped, tag = 'scoped memory for tpu_custom_call.1']
    #allocation8 [shape = 'u8[1024]{0}', space=vmem, size = 0x400, scoped, tag = 'input window, operand 5']
    #allocation9 [shape = 'u8[1024]{0}', space=vmem, size = 0x400, scoped, tag = 'input window, operand 6']
    #allocation10 [shape = 's32[2]{0}', space=sflag, size = 0x8, scoped, tag = 'scoped memory for tpu_custom_call.1']
    #allocation11 [shape = 'u8[1024]{0}', space=vmem, size = 0x400, scoped, tag = 'input window, operand 8']
    #allocation12 [shape = 'u8[8192]{0}', space=vmem, size = 0x2000, scoped, tag = 'output window, operand 0, single buffered']
    %18 = vsyncpa [#allocation4], 0
    %19 = vsyncpa [#allocation7], 0
    %s20 = scalar_lea.sflag [#allocation7], 1
    %21 = vsyncpa %s20, 0
    %22 = vsyncpa [#allocation10], 0
    %s23 = scalar_lea.sflag [#allocation10], 1
    %24 = vsyncpa %s23, 0
    %25 = vsyncpa [#allocation5], 0
    loop: start=0, step=1, limit=4
    $region2: #{tpu_custom_call.1} parent=1 // loop_pre_header
      _
    $region3: #{tpu_custom_call.1} parent=1 // loop_header
      %s27 = sphi 0, %s31
      %p28 = scmp.ge.s32.totalorder %s27, 4
      %s35 = sphi 0, %s35
      %s37 = sphi 0, %s35
      %s38 = sphi 0, %s37
      %s52 = sphi 0, %s38
      %s58 = sphi 0, %s60
      %s61 = sphi 0, %s58
      %s62 = sphi 0, %s61
      %s78 = sphi 0, %s62
      %s84 = sphi 0, %s86
      %s87 = sphi 0, %s84
      %s88 = sphi 0, %s87
      %s104 = sphi 0, %s88
      %s110 = sphi 0, %s112
      %s113 = sphi 0, %s110
      %s114 = sphi 0, %s113
      %s130 = sphi 0, %s114
      %s136 = sphi 0, %s138
      %s139 = sphi 0, %s136
      %s140 = sphi 0, %s139
      %s156 = sphi 0, %s140
      %s162 = sphi 0, %s164
      %s165 = sphi 0, %s162
      %s166 = sphi 0, %s165
      %s182 = sphi 0, %s166
      %s188 = sphi 0, %s190
      %s191 = sphi 0, %s188
      %s192 = sphi 0, %s191
      %s208 = sphi 0, %s192
      %s214 = sphi 0, %s216
      %s217 = sphi 0, %s214
      %s218 = sphi 0, %s217
      %s234 = sphi 0, %s218
      %s240 = sphi 0, %s242
      %s243 = sphi 0, %s240
      %s244 = sphi 0, %s243
      %s260 = sphi 0, %s244
      %s266 = sphi 0, %s268
      %s269 = sphi 0, %s266
      %s270 = sphi 0, %s269
      %s286 = sphi 0, %s270
      %s292 = sphi 0, %s294
      %s295 = sphi 0, %s292
      %s296 = sphi 0, %s295
      %s312 = sphi 0, %s296
      %s318 = sphi 0, %s320
      %s321 = sphi 0, %s318
      %s322 = sphi 0, %s321
      %s338 = sphi 0, %s322
      %s344 = sphi 0, %s346
      %s347 = sphi 0, %s344
      %s348 = sphi 0, %s347
      %s364 = sphi 0, %s348
      %s368 = sphi 0, %s368
      %s370 = sphi 0, %s368
      %s371 = sphi 0, %s370
      %s385 = sphi 0, %s371
    $region4: #{tpu_custom_call.1} parent=1 // loop_header_branch
      %30 = sbr.rel (%p28) target = $region8
    $region5: #{tpu_custom_call.1} parent=1 // loop_body
      %s32 = ssub.s32 %s27, 1
      %s33 = ssub.s32 %s27, 2
      %s34 = sadd.s32 %s27, 1
      %s36 = sadd.s32 %s35, 1
      %p39 = scmp.eq.s32.totalorder %s27, 1
      %p40 = scmp.ne.s32.totalorder %s35, %s37
      %p41 = scmp.eq.s32.totalorder %s27, 0
      %p42 = por %p40, %p41
      %p43 = scmp.ne.s32.totalorder %s35, %s37
      %p44 = scmp.eq.s32.totalorder %s32, 1
      %p45 = por %p43, %p44
      %p46 = scmp.ne.s32.totalorder %s37, %s38
      %p47 = scmp.eq.s32.totalorder %s32, 0
      %p48 = por %p46, %p47
      %p49 = scmp.ne.s32.totalorder %s37, %s38
      %p50 = scmp.eq.s32.totalorder %s33, 1
      %p51 = por %p49, %p50
      %p53 = scmp.ne.s32.totalorder %s38, %s52
      %p54 = scmp.eq.s32.totalorder %s33, 0
      %p55 = por %p53, %p54
      %s56 = ssub.s32 %s27, %s34
      %p57 = scmp.eq.s32.totalorder %s56, 0
      %s59 = sadd.s32 %s58, 1
      %s60 = scalar_select %p57, %s58, %s59
      %p63 = pneg %p57
      %p64 = scmp.eq.s32.totalorder %s27, 1
      %p65 = por %p63, %p64
      %p66 = scmp.ne.s32.totalorder %s58, %s61
      %p67 = scmp.eq.s32.totalorder %s27, 0
      %p68 = por %p66, %p67
      %p69 = scmp.ne.s32.totalorder %s58, %s61
      %p70 = scmp.eq.s32.totalorder %s32, 1
      %p71 = por %p69, %p70
      %p72 = scmp.ne.s32.totalorder %s61, %s62
      %p73 = scmp.eq.s32.totalorder %s32, 0
      %p74 = por %p72, %p73
      %p75 = scmp.ne.s32.totalorder %s61, %s62
      %p76 = scmp.eq.s32.totalorder %s33, 1
      %p77 = por %p75, %p76
      %p79 = scmp.ne.s32.totalorder %s62, %s78
      %p80 = scmp.eq.s32.totalorder %s33, 0
      %p81 = por %p79, %p80
      %s82 = ssub.s32 %s27, %s34
      %p83 = scmp.eq.s32.totalorder %s82, 0
      %s85 = sadd.s32 %s84, 1
      %s86 = scalar_select %p83, %s84, %s85
      %p89 = pneg %p83
      %p90 = scmp.eq.s32.totalorder %s27, 1
      %p91 = por %p89, %p90
      %p92 = scmp.ne.s32.totalorder %s84, %s87
      %p93 = scmp.eq.s32.totalorder %s27, 0
      %p94 = por %p92, %p93
      %p95 = scmp.ne.s32.totalorder %s84, %s87
      %p96 = scmp.eq.s32.totalorder %s32, 1
      %p97 = por %p95, %p96
      %p98 = scmp.ne.s32.totalorder %s87, %s88
      %p99 = scmp.eq.s32.totalorder %s32, 0
      %p100 = por %p98, %p99
      %p101 = scmp.ne.s32.totalorder %s87, %s88
      %p102 = scmp.eq.s32.totalorder %s33, 1
      %p103 = por %p101, %p102
      %p105 = scmp.ne.s32.totalorder %s88, %s104
      %p106 = scmp.eq.s32.totalorder %s33, 0
      %p107 = por %p105, %p106
      %s108 = ssub.s32 %s27, %s34
      %p109 = scmp.eq.s32.totalorder %s108, 0
      %s111 = sadd.s32 %s110, 1
      %s112 = scalar_select %p109, %s110, %s111
      %p115 = pneg %p109
      %p116 = scmp.eq.s32.totalorder %s27, 1
      %p117 = por %p115, %p116
      %p118 = scmp.ne.s32.totalorder %s110, %s113
      %p119 = scmp.eq.s32.totalorder %s27, 0
      %p120 = por %p118, %p119
      %p121 = scmp.ne.s32.totalorder %s110, %s113
      %p122 = scmp.eq.s32.totalorder %s32, 1
      %p123 = por %p121, %p122
      %p124 = scmp.ne.s32.totalorder %s113, %s114
      %p125 = scmp.eq.s32.totalorder %s32, 0
      %p126 = por %p124, %p125
      %p127 = scmp.ne.s32.totalorder %s113, %s114
      %p128 = scmp.eq.s32.totalorder %s33, 1
      %p129 = por %p127, %p128
      %p131 = scmp.ne.s32.totalorder %s114, %s130
      %p132 = scmp.eq.s32.totalorder %s33, 0
      %p133 = por %p131, %p132
      %s134 = ssub.s32 %s27, %s34
      %p135 = scmp.eq.s32.totalorder %s134, 0
      %s137 = sadd.s32 %s136, 1
      %s138 = scalar_select %p135, %s136, %s137
      %p141 = pneg %p135
      %p142 = scmp.eq.s32.totalorder %s27, 1
      %p143 = por %p141, %p142
      %p144 = scmp.ne.s32.totalorder %s136, %s139
      %p145 = scmp.eq.s32.totalorder %s27, 0
      %p146 = por %p144, %p145
      %p147 = scmp.ne.s32.totalorder %s136, %s139
      %p148 = scmp.eq.s32.totalorder %s32, 1
      %p149 = por %p147, %p148
      %p150 = scmp.ne.s32.totalorder %s139, %s140
      %p151 = scmp.eq.s32.totalorder %s32, 0
      %p152 = por %p150, %p151
      %p153 = scmp.ne.s32.totalorder %s139, %s140
      %p154 = scmp.eq.s32.totalorder %s33, 1
      %p155 = por %p153, %p154
      %p157 = scmp.ne.s32.totalorder %s140, %s156
      %p158 = scmp.eq.s32.totalorder %s33, 0
      %p159 = por %p157, %p158
      %s160 = ssub.s32 %s27, %s34
      %p161 = scmp.eq.s32.totalorder %s160, 0
      %s163 = sadd.s32 %s162, 1
      %s164 = scalar_select %p161, %s162, %s163
      %p167 = pneg %p161
      %p168 = scmp.eq.s32.totalorder %s27, 1
      %p169 = por %p167, %p168
      %p170 = scmp.ne.s32.totalorder %s162, %s165
      %p171 = scmp.eq.s32.totalorder %s27, 0
      %p172 = por %p170, %p171
      %p173 = scmp.ne.s32.totalorder %s162, %s165
      %p174 = scmp.eq.s32.totalorder %s32, 1
      %p175 = por %p173, %p174
      %p176 = scmp.ne.s32.totalorder %s165, %s166
      %p177 = scmp.eq.s32.totalorder %s32, 0
      %p178 = por %p176, %p177
      %p179 = scmp.ne.s32.totalorder %s165, %s166
      %p180 = scmp.eq.s32.totalorder %s33, 1
      %p181 = por %p179, %p180
      %p183 = scmp.ne.s32.totalorder %s166, %s182
      %p184 = scmp.eq.s32.totalorder %s33, 0
      %p185 = por %p183, %p184
      %s186 = ssub.s32 %s27, %s34
      %p187 = scmp.eq.s32.totalorder %s186, 0
      %s189 = sadd.s32 %s188, 1
      %s190 = scalar_select %p187, %s188, %s189
      %p193 = pneg %p187
      %p194 = scmp.eq.s32.totalorder %s27, 1
      %p195 = por %p193, %p194
      %p196 = scmp.ne.s32.totalorder %s188, %s191
      %p197 = scmp.eq.s32.totalorder %s27, 0
      %p198 = por %p196, %p197
      %p199 = scmp.ne.s32.totalorder %s188, %s191
      %p200 = scmp.eq.s32.totalorder %s32, 1
      %p201 = por %p199, %p200
      %p202 = scmp.ne.s32.totalorder %s191, %s192
      %p203 = scmp.eq.s32.totalorder %s32, 0
      %p204 = por %p202, %p203
      %p205 = scmp.ne.s32.totalorder %s191, %s192
      %p206 = scmp.eq.s32.totalorder %s33, 1
      %p207 = por %p205, %p206
      %p209 = scmp.ne.s32.totalorder %s192, %s208
      %p210 = scmp.eq.s32.totalorder %s33, 0
      %p211 = por %p209, %p210
      %s212 = ssub.s32 %s27, %s34
      %p213 = scmp.eq.s32.totalorder %s212, 0
      %s215 = sadd.s32 %s214, 1
      %s216 = scalar_select %p213, %s214, %s215
      %p219 = pneg %p213
      %p220 = scmp.eq.s32.totalorder %s27, 1
      %p221 = por %p219, %p220
      %p222 = scmp.ne.s32.totalorder %s214, %s217
      %p223 = scmp.eq.s32.totalorder %s27, 0
      %p224 = por %p222, %p223
      %p225 = scmp.ne.s32.totalorder %s214, %s217
      %p226 = scmp.eq.s32.totalorder %s32, 1
      %p227 = por %p225, %p226
      %p228 = scmp.ne.s32.totalorder %s217, %s218
      %p229 = scmp.eq.s32.totalorder %s32, 0
      %p230 = por %p228, %p229
      %p231 = scmp.ne.s32.totalorder %s217, %s218
      %p232 = scmp.eq.s32.totalorder %s33, 1
      %p233 = por %p231, %p232
      %p235 = scmp.ne.s32.totalorder %s218, %s234
      %p236 = scmp.eq.s32.totalorder %s33, 0
      %p237 = por %p235, %p236
      %s238 = ssub.s32 %s27, %s34
      %p239 = scmp.eq.s32.totalorder %s238, 0
      %s241 = sadd.s32 %s240, 1
      %s242 = scalar_select %p239, %s240, %s241
      %p245 = pneg %p239
      %p246 = scmp.eq.s32.totalorder %s27, 1
      %p247 = por %p245, %p246
      %p248 = scmp.ne.s32.totalorder %s240, %s243
      %p249 = scmp.eq.s32.totalorder %s27, 0
      %p250 = por %p248, %p249
      %p251 = scmp.ne.s32.totalorder %s240, %s243
      %p252 = scmp.eq.s32.totalorder %s32, 1
      %p253 = por %p251, %p252
      %p254 = scmp.ne.s32.totalorder %s243, %s244
      %p255 = scmp.eq.s32.totalorder %s32, 0
      %p256 = por %p254, %p255
      %p257 = scmp.ne.s32.totalorder %s243, %s244
      %p258 = scmp.eq.s32.totalorder %s33, 1
      %p259 = por %p257, %p258
      %p261 = scmp.ne.s32.totalorder %s244, %s260
      %p262 = scmp.eq.s32.totalorder %s33, 0
      %p263 = por %p261, %p262
      %s264 = ssub.s32 %s27, %s34
      %p265 = scmp.eq.s32.totalorder %s264, 0
      %s267 = sadd.s32 %s266, 1
      %s268 = scalar_select %p265, %s266, %s267
      %p271 = pneg %p265
      %p272 = scmp.eq.s32.totalorder %s27, 1
      %p273 = por %p271, %p272
      %p274 = scmp.ne.s32.totalorder %s266, %s269
      %p275 = scmp.eq.s32.totalorder %s27, 0
      %p276 = por %p274, %p275
      %p277 = scmp.ne.s32.totalorder %s266, %s269
      %p278 = scmp.eq.s32.totalorder %s32, 1
      %p279 = por %p277, %p278
      %p280 = scmp.ne.s32.totalorder %s269, %s270
      %p281 = scmp.eq.s32.totalorder %s32, 0
      %p282 = por %p280, %p281
      %p283 = scmp.ne.s32.totalorder %s269, %s270
      %p284 = scmp.eq.s32.totalorder %s33, 1
      %p285 = por %p283, %p284
      %p287 = scmp.ne.s32.totalorder %s270, %s286
      %p288 = scmp.eq.s32.totalorder %s33, 0
      %p289 = por %p287, %p288
      %s290 = ssub.s32 %s27, %s34
      %p291 = scmp.eq.s32.totalorder %s290, 0
      %s293 = sadd.s32 %s292, 1
      %s294 = scalar_select %p291, %s292, %s293
      %p297 = pneg %p291
      %p298 = scmp.eq.s32.totalorder %s27, 1
      %p299 = por %p297, %p298
      %p300 = scmp.ne.s32.totalorder %s292, %s295
      %p301 = scmp.eq.s32.totalorder %s27, 0
      %p302 = por %p300, %p301
      %p303 = scmp.ne.s32.totalorder %s292, %s295
      %p304 = scmp.eq.s32.totalorder %s32, 1
      %p305 = por %p303, %p304
      %p306 = scmp.ne.s32.totalorder %s295, %s296
      %p307 = scmp.eq.s32.totalorder %s32, 0
      %p308 = por %p306, %p307
      %p309 = scmp.ne.s32.totalorder %s295, %s296
      %p310 = scmp.eq.s32.totalorder %s33, 1
      %p311 = por %p309, %p310
      %p313 = scmp.ne.s32.totalorder %s296, %s312
      %p314 = scmp.eq.s32.totalorder %s33, 0
      %p315 = por %p313, %p314
      %s316 = ssub.s32 %s27, %s34
      %p317 = scmp.eq.s32.totalorder %s316, 0
      %s319 = sadd.s32 %s318, 1
      %s320 = scalar_select %p317, %s318, %s319
      %p323 = pneg %p317
      %p324 = scmp.eq.s32.totalorder %s27, 1
      %p325 = por %p323, %p324
      %p326 = scmp.ne.s32.totalorder %s318, %s321
      %p327 = scmp.eq.s32.totalorder %s27, 0
      %p328 = por %p326, %p327
      %p329 = scmp.ne.s32.totalorder %s318, %s321
      %p330 = scmp.eq.s32.totalorder %s32, 1
      %p331 = por %p329, %p330
      %p332 = scmp.ne.s32.totalorder %s321, %s322
      %p333 = scmp.eq.s32.totalorder %s32, 0
      %p334 = por %p332, %p333
      %p335 = scmp.ne.s32.totalorder %s321, %s322
      %p336 = scmp.eq.s32.totalorder %s33, 1
      %p337 = por %p335, %p336
      %p339 = scmp.ne.s32.totalorder %s322, %s338
      %p340 = scmp.eq.s32.totalorder %s33, 0
      %p341 = por %p339, %p340
      %s342 = ssub.s32 %s27, %s34
      %p343 = scmp.eq.s32.totalorder %s342, 0
      %s345 = sadd.s32 %s344, 1
      %s346 = scalar_select %p343, %s344, %s345
      %p349 = pneg %p343
      %p350 = scmp.eq.s32.totalorder %s27, 1
      %p351 = por %p349, %p350
      %p352 = scmp.ne.s32.totalorder %s344, %s347
      %p353 = scmp.eq.s32.totalorder %s27, 0
      %p354 = por %p352, %p353
      %p355 = scmp.ne.s32.totalorder %s344, %s347
      %p356 = scmp.eq.s32.totalorder %s32, 1
      %p357 = por %p355, %p356
      %p358 = scmp.ne.s32.totalorder %s347, %s348
      %p359 = scmp.eq.s32.totalorder %s32, 0
      %p360 = por %p358, %p359
      %p361 = scmp.ne.s32.totalorder %s347, %s348
      %p362 = scmp.eq.s32.totalorder %s33, 1
      %p363 = por %p361, %p362
      %p365 = scmp.ne.s32.totalorder %s348, %s364
      %p366 = scmp.eq.s32.totalorder %s33, 0
      %p367 = por %p365, %p366
      %s369 = sadd.s32 %s368, 1
      %p372 = scmp.eq.s32.totalorder %s27, 1
      %p373 = scmp.ne.s32.totalorder %s368, %s370
      %p374 = scmp.eq.s32.totalorder %s27, 0
      %p375 = por %p373, %p374
      %p376 = scmp.ne.s32.totalorder %s368, %s370
      %p377 = scmp.eq.s32.totalorder %s32, 1
      %p378 = por %p376, %p377
      %p379 = scmp.ne.s32.totalorder %s370, %s371
      %p380 = scmp.eq.s32.totalorder %s32, 0
      %p381 = por %p379, %p380
      %p382 = scmp.ne.s32.totalorder %s370, %s371
      %p383 = scmp.eq.s32.totalorder %s33, 1
      %p384 = por %p382, %p383
      %p386 = scmp.ne.s32.totalorder %s371, %s385
      %p387 = scmp.eq.s32.totalorder %s33, 0
      %p388 = por %p386, %p387
      %p389 = scmp.le.s32.totalorder 1, %s27
      %p390 = scmp.lt.s32.totalorder %s27, 3
      %p391 = pnand %p389, %p390
      %p392 = pneg %p391
      // Predicated region
      $region9: #{tpu_custom_call.1} parent=5 // pred_check
        _
      $region10: #{tpu_custom_call.1} parent=5 // pred_check_branch
        %394 = sbr.rel (%p391) target = $region12
      $region11: #{tpu_custom_call.1} parent=5 // pred_region
        %s395 = ssub.s32 %s27, 1
        // Predicated region
        $region13: #{tpu_custom_call.1} parent=11 // pred_check
          %p396 = pneg %p48
        $region14: #{tpu_custom_call.1} parent=11 // pred_check_branch
          %398 = sbr.rel (%p396) target = $region16
        $region15: #{tpu_custom_call.1} parent=11 // pred_region
          %s400 = ssub.s32 256, 256
          %401 = vsyncadd [#allocation4], %s400
          %s402 = sshll.u32 [#allocation3], 4
          %s403 = int_to_ptr.vmem [resolvable:$true] %s402
          %408 = dma.hbm_to_vmem [thread:$0]  %s0, 256, %s403, [#allocation4], 128, 128, 8
        $region16: #{tpu_custom_call.1} parent=11 // pred_fallthru
          _
      $region12: #{tpu_custom_call.1} parent=5 // pred_fallthru
        _
      %p409 = scmp.lt.s32.totalorder %s27, 2
      // Predicated region
      $region17: #{tpu_custom_call.1} parent=5 // pred_check
        %p410 = pneg %p409
      $region18: #{tpu_custom_call.1} parent=5 // pred_check_branch
        %412 = sbr.rel (%p410) target = $region20
      $region19: #{tpu_custom_call.1} parent=5 // pred_region
        // Predicated region
        $region21: #{tpu_custom_call.1} parent=19 // pred_check
          %p413 = pneg %p68
        $region22: #{tpu_custom_call.1} parent=19 // pred_check_branch
          %415 = sbr.rel (%p413) target = $region24
        $region23: #{tpu_custom_call.1} parent=19 // pred_region
          %p416 = scmp.lt.s32.totalorder %s27, 1
          %s417 = scalar_select %p416, %s27, 1
          %s418 = smul.addr %s417, 4
          %s419 = smul.addr %s418, 4
          %s420 = scalar_lea.vmem %s1, %s419
        $region24: #{tpu_custom_call.1} parent=19 // pred_fallthru
          _
        // Predicated region
        $region25: #{tpu_custom_call.1} parent=19 // pred_check
          %p421 = pneg %p94
        $region26: #{tpu_custom_call.1} parent=19 // pred_check_branch
          %423 = sbr.rel (%p421) target = $region28
        $region27: #{tpu_custom_call.1} parent=19 // pred_region
          %p424 = scmp.lt.s32.totalorder %s27, 1
          %s425 = scalar_select %p424, %s27, 1
          %s426 = scalar_lea.vmem %s2, %s425
        $region28: #{tpu_custom_call.1} parent=19 // pred_fallthru
          _
        // Predicated region
        $region29: #{tpu_custom_call.1} parent=19 // pred_check
          %p427 = pneg %p120
        $region30: #{tpu_custom_call.1} parent=19 // pred_check_branch
          %429 = sbr.rel (%p427) target = $region32
        $region31: #{tpu_custom_call.1} parent=19 // pred_region
          %p430 = scmp.lt.s32.totalorder %s27, 1
          %s431 = scalar_select %p430, %s27, 1
          %s432 = smul.addr %s431, 4
          %s433 = smul.addr %s432, 4
          %s434 = scalar_lea.vmem %s3, %s433
        $region32: #{tpu_custom_call.1} parent=19 // pred_fallthru
          _
        // Predicated region
        $region33: #{tpu_custom_call.1} parent=19 // pred_check
          %p435 = pneg %p146
        $region34: #{tpu_custom_call.1} parent=19 // pred_check_branch
          %437 = sbr.rel (%p435) target = $region36
        $region35: #{tpu_custom_call.1} parent=19 // pred_region
          %s438 = sand.u32 %s27, 1
          %s439 = scalar_lea.sflag [#allocation7], %s438
          %s440 = sand.u32 %s136, 1
          %s441 = scalar_lea.vmem [#allocation6], %s440
          %s443 = ssub.s32 16, 16
          %444 = vsyncadd %s439, %s443
          %s445 = smul.addr %s27, 16
          %s446 = scalar_lea.hbm %s4, %s445
          %s448 = sshll.u32 %s441, 4
          %s449 = int_to_ptr.vmem [resolvable:$true] %s448
          %451 = dma.hbm_to_vmem [thread:$0]  %s446, 16, %s449, %s439
        $region36: #{tpu_custom_call.1} parent=19 // pred_fallthru
          _
        // Predicated region
        $region37: #{tpu_custom_call.1} parent=19 // pred_check
          %p452 = pneg %p172
        $region38: #{tpu_custom_call.1} parent=19 // pred_check_branch
          %454 = sbr.rel (%p452) target = $region40
        $region39: #{tpu_custom_call.1} parent=19 // pred_region
          %s455 = sand.u32 %s27, 1
          %s456 = scalar_lea.sflag [#allocation7], %s455
          %s457 = sand.u32 %s162, 1
          %s458 = scalar_lea.vmem [#allocation8], %s457
          %s460 = ssub.s32 16, 16
          %461 = vsyncadd %s456, %s460
          %s462 = smul.addr %s27, 16
          %s463 = scalar_lea.hbm %s5, %s462
          %s465 = sshll.u32 %s458, 4
          %s466 = int_to_ptr.vmem [resolvable:$true] %s465
          %468 = dma.hbm_to_vmem [thread:$0]  %s463, 16, %s466, %s456
        $region40: #{tpu_custom_call.1} parent=19 // pred_fallthru
          _
        // Predicated region
        $region41: #{tpu_custom_call.1} parent=19 // pred_check
          %p469 = pneg %p198
        $region42: #{tpu_custom_call.1} parent=19 // pred_check_branch
          %471 = sbr.rel (%p469) target = $region44
        $region43: #{tpu_custom_call.1} parent=19 // pred_region
          %s472 = sand.u32 %s27, 1
          %s473 = scalar_lea.sflag [#allocation10], %s472
          %s474 = sand.u32 %s188, 1
          %s475 = scalar_lea.vmem [#allocation9], %s474
          %s477 = ssub.s32 16, 16
          %478 = vsyncadd %s473, %s477
          %s479 = smul.addr %s27, 16
          %s480 = scalar_lea.hbm %s6, %s479
          %s482 = sshll.u32 %s475, 4
          %s483 = int_to_ptr.vmem [resolvable:$true] %s482
          %485 = dma.hbm_to_vmem [thread:$0]  %s480, 16, %s483, %s473
        $region44: #{tpu_custom_call.1} parent=19 // pred_fallthru
          _
        // Predicated region
        $region45: #{tpu_custom_call.1} parent=19 // pred_check
          %p486 = pneg %p224
        $region46: #{tpu_custom_call.1} parent=19 // pred_check_branch
          %488 = sbr.rel (%p486) target = $region48
        $region47: #{tpu_custom_call.1} parent=19 // pred_region
          %p489 = scmp.lt.s32.totalorder %s27, 1
          %s490 = scalar_select %p489, %s27, 1
          %s491 = smul.addr %s490, 4
          %s492 = smul.addr %s491, 4
          %s493 = scalar_lea.vmem %s7, %s492
        $region48: #{tpu_custom_call.1} parent=19 // pred_fallthru
          _
        // Predicated region
        $region49: #{tpu_custom_call.1} parent=19 // pred_check
          %p494 = pneg %p250
        $region50: #{tpu_custom_call.1} parent=19 // pred_check_branch
          %496 = sbr.rel (%p494) target = $region52
        $region51: #{tpu_custom_call.1} parent=19 // pred_region
          %s497 = sand.u32 %s27, 1
          %s498 = scalar_lea.sflag [#allocation10], %s497
          %s499 = sand.u32 %s240, 1
          %s500 = scalar_lea.vmem [#allocation11], %s499
          %s502 = ssub.s32 16, 16
          %503 = vsyncadd %s498, %s502
          %s504 = smul.addr %s27, 16
          %s505 = scalar_lea.hbm %s8, %s504
          %s507 = sshll.u32 %s500, 4
          %s508 = int_to_ptr.vmem [resolvable:$true] %s507
          %510 = dma.hbm_to_vmem [thread:$0]  %s505, 16, %s508, %s498
        $region52: #{tpu_custom_call.1} parent=19 // pred_fallthru
          _
        // Predicated region
        $region53: #{tpu_custom_call.1} parent=19 // pred_check
          %p511 = pneg %p276
        $region54: #{tpu_custom_call.1} parent=19 // pred_check_branch
          %513 = sbr.rel (%p511) target = $region56
        $region55: #{tpu_custom_call.1} parent=19 // pred_region
          %p514 = scmp.lt.s32.totalorder %s27, 1
          %s515 = scalar_select %p514, %s27, 1
          %s516 = smul.addr %s515, 8
          %s517 = smul.addr %s516, 4
          %s518 = scalar_lea.vmem %s9, %s517
        $region56: #{tpu_custom_call.1} parent=19 // pred_fallthru
          _
        // Predicated region
        $region57: #{tpu_custom_call.1} parent=19 // pred_check
          %p519 = pneg %p302
        $region58: #{tpu_custom_call.1} parent=19 // pred_check_branch
          %521 = sbr.rel (%p519) target = $region60
        $region59: #{tpu_custom_call.1} parent=19 // pred_region
          %p522 = scmp.lt.s32.totalorder %s27, 1
          %s523 = scalar_select %p522, %s27, 1
          %s524 = scalar_lea.vmem %s10, %s523
        $region60: #{tpu_custom_call.1} parent=19 // pred_fallthru
          _
        // Predicated region
        $region61: #{tpu_custom_call.1} parent=19 // pred_check
          %p525 = pneg %p328
        $region62: #{tpu_custom_call.1} parent=19 // pred_check_branch
          %527 = sbr.rel (%p525) target = $region64
        $region63: #{tpu_custom_call.1} parent=19 // pred_region
          %p528 = scmp.lt.s32.totalorder %s27, 1
          %s529 = scalar_select %p528, %s27, 1
          %s530 = scalar_lea.vmem %s11, %s529
        $region64: #{tpu_custom_call.1} parent=19 // pred_fallthru
          _
        // Predicated region
        $region65: #{tpu_custom_call.1} parent=19 // pred_check
          %p531 = pneg %p354
        $region66: #{tpu_custom_call.1} parent=19 // pred_check_branch
          %533 = sbr.rel (%p531) target = $region68
        $region67: #{tpu_custom_call.1} parent=19 // pred_region
          %p534 = scmp.lt.s32.totalorder %s27, 1
          %s535 = scalar_select %p534, %s27, 1
          %s536 = scalar_lea.vmem %s12, %s535
        $region68: #{tpu_custom_call.1} parent=19 // pred_fallthru
          _
      $region20: #{tpu_custom_call.1} parent=5 // pred_fallthru
        _
      %p537 = scmp.le.s32.totalorder 1, %s27
      %p538 = scmp.lt.s32.totalorder %s27, 3
      %p539 = pnand %p537, %p538
      %p540 = pneg %p539
      // Predicated region
      $region69: #{tpu_custom_call.1} parent=5 // pred_check
        _
      $region70: #{tpu_custom_call.1} parent=5 // pred_check_branch
        %542 = sbr.rel (%p539) target = $region72
      $region71: #{tpu_custom_call.1} parent=5 // pred_region
        %s543 = ssub.s32 %s27, 1
        // Predicated region
        $region73: #{tpu_custom_call.1} parent=71 // pred_check
          %p544 = pneg %p48
        $region74: #{tpu_custom_call.1} parent=71 // pred_check_branch
          %546 = sbr.rel (%p544) target = $region76
        $region75: #{tpu_custom_call.1} parent=71 // pred_region
          %547 = dma.done [#allocation4], 256
        $region76: #{tpu_custom_call.1} parent=71 // pred_fallthru
          _
        %s548 = sand.u32 %s32, 1
        %s549 = scalar_lea.sflag [#allocation7], %s548
        %s550 = sand.u32 %s139, 1
        %s551 = scalar_lea.vmem [#allocation6], %s550
        // Predicated region
        $region77: #{tpu_custom_call.1} parent=71 // pred_check
          %p552 = pneg %p152
        $region78: #{tpu_custom_call.1} parent=71 // pred_check_branch
          %554 = sbr.rel (%p552) target = $region80
        $region79: #{tpu_custom_call.1} parent=71 // pred_region
          %555 = dma.done %s549, 16
        $region80: #{tpu_custom_call.1} parent=71 // pred_fallthru
          _
        %s556 = sand.u32 %s32, 1
        %s557 = scalar_lea.sflag [#allocation7], %s556
        %s558 = sand.u32 %s165, 1
        %s559 = scalar_lea.vmem [#allocation8], %s558
        // Predicated region
        $region81: #{tpu_custom_call.1} parent=71 // pred_check
          %p560 = pneg %p178
        $region82: #{tpu_custom_call.1} parent=71 // pred_check_branch
          %562 = sbr.rel (%p560) target = $region84
        $region83: #{tpu_custom_call.1} parent=71 // pred_region
          %563 = dma.done %s557, 16
        $region84: #{tpu_custom_call.1} parent=71 // pred_fallthru
          _
        %s564 = sand.u32 %s32, 1
        %s565 = scalar_lea.sflag [#allocation10], %s564
        %s566 = sand.u32 %s191, 1
        %s567 = scalar_lea.vmem [#allocation9], %s566
        // Predicated region
        $region85: #{tpu_custom_call.1} parent=71 // pred_check
          %p568 = pneg %p204
        $region86: #{tpu_custom_call.1} parent=71 // pred_check_branch
          %570 = sbr.rel (%p568) target = $region88
        $region87: #{tpu_custom_call.1} parent=71 // pred_region
          %571 = dma.done %s565, 16
        $region88: #{tpu_custom_call.1} parent=71 // pred_fallthru
          _
        %s572 = sand.u32 %s32, 1
        %s573 = scalar_lea.sflag [#allocation10], %s572
        %s574 = sand.u32 %s243, 1
        %s575 = scalar_lea.vmem [#allocation11], %s574
        // Predicated region
        $region89: #{tpu_custom_call.1} parent=71 // pred_check
          %p576 = pneg %p256
        $region90: #{tpu_custom_call.1} parent=71 // pred_check_branch
          %578 = sbr.rel (%p576) target = $region92
        $region91: #{tpu_custom_call.1} parent=71 // pred_region
          %579 = dma.done %s573, 16
        $region92: #{tpu_custom_call.1} parent=71 // pred_fallthru
          _
        %p580 = pneg %p48
        %p581 = pneg %p45
        %p582 = scmp.lt.s32.totalorder %s32, 1
        %s583 = scalar_select %p582, %s32, 1
        %s584 = smul.addr %s583, 4
        %s585 = smul.addr %s584, 4
        %s586 = scalar_lea.vmem %s1, %s585
        %p587 = pneg %p74
        %p588 = pneg %p71
        %p589 = scmp.lt.s32.totalorder %s32, 1
        %s590 = scalar_select %p589, %s32, 1
        %s591 = scalar_lea.vmem %s2, %s590
        %p592 = pneg %p100
        %p593 = pneg %p97
        %p594 = scmp.lt.s32.totalorder %s32, 1
        %s595 = scalar_select %p594, %s32, 1
        %s596 = smul.addr %s595, 4
        %s597 = smul.addr %s596, 4
        %s598 = scalar_lea.vmem %s3, %s597
        %p599 = pneg %p126
        %p600 = pneg %p123
        %s601 = sand.u32 %s32, 1
        %s602 = scalar_lea.sflag [#allocation7], %s601
        %s603 = sand.u32 %s139, 1
        %s604 = scalar_lea.vmem [#allocation6], %s603
        %p605 = pneg %p152
        %p606 = pneg %p149
        %s607 = sand.u32 %s32, 1
        %s608 = scalar_lea.sflag [#allocation7], %s607
        %s609 = sand.u32 %s165, 1
        %s610 = scalar_lea.vmem [#allocation8], %s609
        %p611 = pneg %p178
        %p612 = pneg %p175
        %s613 = sand.u32 %s32, 1
        %s614 = scalar_lea.sflag [#allocation10], %s613
        %s615 = sand.u32 %s191, 1
        %s616 = scalar_lea.vmem [#allocation9], %s615
        %p617 = pneg %p204
        %p618 = pneg %p201
        %p619 = scmp.lt.s32.totalorder %s32, 1
        %s620 = scalar_select %p619, %s32, 1
        %s621 = smul.addr %s620, 4
        %s622 = smul.addr %s621, 4
        %s623 = scalar_lea.vmem %s7, %s622
        %p624 = pneg %p230
        %p625 = pneg %p227
        %s626 = sand.u32 %s32, 1
        %s627 = scalar_lea.sflag [#allocation10], %s626
        %s628 = sand.u32 %s243, 1
        %s629 = scalar_lea.vmem [#allocation11], %s628
        %p630 = pneg %p256
        %p631 = pneg %p253
        %p632 = scmp.lt.s32.totalorder %s32, 1
        %s633 = scalar_select %p632, %s32, 1
        %s634 = smul.addr %s633, 8
        %s635 = smul.addr %s634, 4
        %s636 = scalar_lea.vmem %s9, %s635
        %p637 = pneg %p282
        %p638 = pneg %p279
        %p639 = scmp.lt.s32.totalorder %s32, 1
        %s640 = scalar_select %p639, %s32, 1
        %s641 = scalar_lea.vmem %s10, %s640
        %p642 = pneg %p308
        %p643 = pneg %p305
        %p644 = scmp.lt.s32.totalorder %s32, 1
        %s645 = scalar_select %p644, %s32, 1
        %s646 = scalar_lea.vmem %s11, %s645
        %p647 = pneg %p334
        %p648 = pneg %p331
        %p649 = scmp.lt.s32.totalorder %s32, 1
        %s650 = scalar_select %p649, %s32, 1
        %s651 = scalar_lea.vmem %s12, %s650
        %p652 = pneg %p360
        %p653 = pneg %p357
        %p654 = pneg %p381
        %p655 = pneg %p378
        %p656 = scmp.lt.s32.totalorder %s32, 1
        %s657 = scalar_select %p656, %s32, 1
        %s658 = smul.addr %s657, 4
        %s659 = smul.addr %s658, 4
        %s660 = scalar_lea.vmem %s1, %s659
        %p661 = scmp.lt.s32.totalorder %s32, 1
        %s662 = scalar_select %p661, %s32, 1
        %s663 = scalar_lea.vmem %s2, %s662
        %p664 = scmp.lt.s32.totalorder %s32, 1
        %s665 = scalar_select %p664, %s32, 1
        %s666 = smul.addr %s665, 4
        %s667 = smul.addr %s666, 4
        %s668 = scalar_lea.vmem %s3, %s667
        %p669 = scmp.lt.s32.totalorder %s32, 1
        %s670 = scalar_select %p669, %s32, 1
        %s671 = smul.addr %s670, 4
        %s672 = smul.addr %s671, 4
        %s673 = scalar_lea.vmem %s7, %s672
        %p674 = scmp.lt.s32.totalorder %s32, 1
        %s675 = scalar_select %p674, %s32, 1
        %s676 = smul.addr %s675, 8
        %s677 = smul.addr %s676, 4
        %s678 = scalar_lea.vmem %s9, %s677
        %p679 = scmp.lt.s32.totalorder %s32, 1
        %s680 = scalar_select %p679, %s32, 1
        %s681 = scalar_lea.vmem %s10, %s680
        %p682 = scmp.lt.s32.totalorder %s32, 1
        %s683 = scalar_select %p682, %s32, 1
        %s684 = scalar_lea.vmem %s11, %s683
        %p685 = scmp.lt.s32.totalorder %s32, 1
        %s686 = scalar_select %p685, %s32, 1
        %s687 = scalar_lea.vmem %s12, %s686
        %p689 = scmp.eq.s32.totalorder %s32, 0
        // Predicated region
        $region93: #{tpu_custom_call.1} parent=71 // pred_check
          %p690 = pneg %p689
        $region94: #{tpu_custom_call.1} parent=71 // pred_check_branch
          %692 = sbr.rel (%p690) target = $region96
        $region95: #{tpu_custom_call.1} parent=71 // pred_region
          %v693 = vld [vmem:[#allocation3] sm:$0xff]
          %v694 = vld [vmem:[#allocation3 + $0x8] sm:$0xff]
          %vm695 = vcmask 261120
          %696 = vst.msk [vmem:[#allocation2] sm:$0xff] %vm695, %v693
          %697 = vst.msk [vmem:[#allocation2 + $0x8] sm:$0xff] %vm695, %v694
        $region96: #{tpu_custom_call.1} parent=71 // pred_fallthru
          _
        %v698 = vld [vmem:[#allocation2] sm:$0xff]
        %v699 = vld [vmem:[#allocation2 + $0x8] sm:$0xff]
        %v700 = vpack.c.bf16 %v699, %v698
        %v701 = vld [vmem:[%s660] sm:$0xf]
        %v702 = vld [vmem:[%s660 + $0x4] sm:$0xf]
        %v703 = vld [vmem:[%s660 + $0x8] sm:$0xf]
        %v704 = vld [vmem:[%s660 + $0xc] sm:$0xf]
        %v705 = vld [vmem:[%s663] sm:$0x1]
        %v707 = vlaneseq
        %v708 = vshrl.u32 %v707, 7
        %v709 = vsub.s32 0, %v708
        %v710 = vrot.slane %v705, %v709
        %v716 = vunpack.c.l.b16 %v701
        %v717 = vunpack.c.l.b16 %v702
        %v718 = vunpack.c.l.b16 %v703
        %v719 = vunpack.c.l.b16 %v704
        %v720 = vpack.c.b16 %v717, %v716
        %v721 = vpack.c.b16 %v719, %v718
        %vm724 = vcmask 261120
        %v726 = vsel %vm724, %v700, 0
        %728 = vmatprep.subr.bf16.mxu0 0
        %729 = vmatpush1.bf16.msra.mxu0 %v720
        %730 = vmatprep.subr.bf16.mxu0 0
        %731 = vmatpush1.bf16.msra.mxu0 %v721
        %732 = vmatprep.subr.bf16.mxu0 0
        %733 = vmatpush1.bf16.msra.mxu0 0
        %734 = vmatprep.subr.bf16.mxu0 0
        %735 = vmatpush1.bf16.msra.mxu0 0
        %736 = vmatprep.subr.bf16.mxu0 0
        %737 = vmatpush1.bf16.msra.mxu0 0
        %738 = vmatprep.subr.bf16.mxu0 0
        %739 = vmatpush1.bf16.msra.mxu0 0
        %740 = vmatprep.subr.bf16.mxu0 0
        %741 = vmatpush1.bf16.msra.mxu0 0
        %742 = vmatprep.subr.bf16.mxu0 0
        %743 = vmatpush1.bf16.msra.mxu0 0
        %744 = vmatprep.subr.bf16.mxu0 0
        %745 = vmatpush1.bf16.msra.mxu0 0
        %746 = vmatprep.subr.bf16.mxu0 0
        %747 = vmatpush1.bf16.msra.mxu0 0
        %748 = vmatprep.subr.bf16.mxu0 0
        %749 = vmatpush1.bf16.msra.mxu0 0
        %750 = vmatprep.subr.bf16.mxu0 0
        %751 = vmatpush1.bf16.msra.mxu0 0
        %752 = vmatprep.subr.bf16.mxu0 0
        %753 = vmatpush1.bf16.msra.mxu0 0
        %754 = vmatprep.subr.bf16.mxu0 0
        %755 = vmatpush1.bf16.msra.mxu0 0
        %756 = vmatprep.subr.bf16.mxu0 0
        %757 = vmatpush1.bf16.msra.mxu0 0
        %758 = vmatprep.subr.bf16.mxu0 0
        %759 = vmatpush1.bf16.msra.mxu0 0
        %760 = vmatprep.mubr.bf16.mxu0 0
        %761 = vmatmul.mubr.bf16.gmra.mrb[0].mxu0 %v726
        %v762 = vpop.f32.mrb[0].mxu0
        %v763 = vadd.f32 %v710, %v762
        %v764 = vpop.f32.mrb[0].mxu0
        %v765 = vpop.f32.mrb[0].mxu0
        %v766 = vadd.f32 %v710, %v765
        %v767 = vpop.f32.mrb[0].mxu0
        %768 = vdwg.mxu0
        %v769 = vmul.f32 %v763, 0.35355338
        %v770 = vmul.f32 %v766, 0.35355338
        %v771 = vpack.c.bf16 %v770, %v769
        %v772 = vpack.c.bf16 %v766, %v763
        %774 = vrot.lane.b32.xlu0 %v772, 96
        %v775 = vpop.permute.xlu0 %774
        %vm776 = vcmask 64512
        %v778 = vsel %vm776, %v771, 0
        %v781 = vsel %vm776, %v775, 0
        %783 = vmatprep.subr.bf16.mxu0 0
        %784 = vmatpush1.bf16.xpose.msra.mxu0 %v781
        %785 = vmatprep.subr.bf16.mxu0 0
        %786 = vmatpush1.bf16.xpose.msra.mxu0 0
        %787 = vmatprep.subr.bf16.mxu0 0
        %788 = vmatpush1.bf16.xpose.msra.mxu0 0
        %789 = vmatprep.subr.bf16.mxu0 0
        %790 = vmatpush1.bf16.xpose.msra.mxu0 0
        %791 = vmatprep.subr.bf16.mxu0 0
        %792 = vmatpush1.bf16.xpose.msra.mxu0 0
        %793 = vmatprep.subr.bf16.mxu0 0
        %794 = vmatpush1.bf16.xpose.msra.mxu0 0
        %795 = vmatprep.subr.bf16.mxu0 0
        %796 = vmatpush1.bf16.xpose.msra.mxu0 0
        %797 = vmatprep.subr.bf16.mxu0 0
        %798 = vmatpush1.bf16.xpose.msra.mxu0 0
        %799 = vmatprep.subr.bf16.mxu0 0
        %800 = vmatpush1.bf16.xpose.msra.mxu0 0
        %801 = vmatprep.subr.bf16.mxu0 0
        %802 = vmatpush1.bf16.xpose.msra.mxu0 0
        %803 = vmatprep.subr.bf16.mxu0 0
        %804 = vmatpush1.bf16.xpose.msra.mxu0 0
        %805 = vmatprep.subr.bf16.mxu0 0
        %806 = vmatpush1.bf16.xpose.msra.mxu0 0
        %807 = vmatprep.subr.bf16.mxu0 0
        %808 = vmatpush1.bf16.xpose.msra.mxu0 0
        %809 = vmatprep.subr.bf16.mxu0 0
        %810 = vmatpush1.bf16.xpose.msra.mxu0 0
        %811 = vmatprep.subr.bf16.mxu0 0
        %812 = vmatpush1.bf16.xpose.msra.mxu0 0
        %813 = vmatprep.subr.bf16.mxu0 0
        %814 = vmatpush1.bf16.xpose.msra.mxu0 0
        %815 = vmatprep.mubr.bf16.mxu0 0
        %816 = vmatmul.mubr.bf16.gmra.mrb[0].mxu0 %v778
        %v817 = vpop.f32.mrb[0].mxu0
        %v818 = vadd.f32 0.0, %v817
        %v819 = vpop.f32.mrb[0].mxu0
        %v820 = vpop.f32.mrb[0].mxu0
        %v821 = vpop.f32.mrb[0].mxu0
        %822 = vdwg.mxu0
        %v823 = vsel %vm776, %v818, -inf
        %824 = vmax.xlane.f32.xlu0 %v823
        %v825 = vpop.xlane.xlu0 %824
        %v826 = vsub.f32 %v818, %v825
        %v827 = vmul.f32 %v826, 1.442695
        %v828 = vpow.pop %v827
        %v829 = vsel %vm776, %v828, 0.0
        %830 = vadd.xlane.f32.xlu0 %v829
        %v831 = vpop.xlane.xlu0 %830
        %v832 = vrcp.pop %v831
        %v833 = vmul.f32 %v828, %v832
        %v834 = vpack.c.bf16 %v833, %v833
        %835 = vrot.lane.b32.xlu0 %v772, 64
        %v836 = vpop.permute.xlu0 %835
        %v838 = vsel %vm776, %v834, 0
        %vm840 = vcmask 1043456
        %v842 = vsel %vm840, %v836, 0
        %844 = vmatprep.subr.bf16.mxu0 0
        %845 = vmatpush1.bf16.msra.mxu0 %v842
        %846 = vmatprep.subr.bf16.mxu0 0
        %847 = vmatpush1.bf16.msra.mxu0 0
        %848 = vmatprep.subr.bf16.mxu0 0
        %849 = vmatpush1.bf16.msra.mxu0 0
        %850 = vmatprep.subr.bf16.mxu0 0
        %851 = vmatpush1.bf16.msra.mxu0 0
        %852 = vmatprep.subr.bf16.mxu0 0
        %853 = vmatpush1.bf16.msra.mxu0 0
        %854 = vmatprep.subr.bf16.mxu0 0
        %855 = vmatpush1.bf16.msra.mxu0 0
        %856 = vmatprep.subr.bf16.mxu0 0
        %857 = vmatpush1.bf16.msra.mxu0 0
        %858 = vmatprep.subr.bf16.mxu0 0
        %859 = vmatpush1.bf16.msra.mxu0 0
        %860 = vmatprep.subr.bf16.mxu0 0
        %861 = vmatpush1.bf16.msra.mxu0 0
        %862 = vmatprep.subr.bf16.mxu0 0
        %863 = vmatpush1.bf16.msra.mxu0 0
        %864 = vmatprep.subr.bf16.mxu0 0
        %865 = vmatpush1.bf16.msra.mxu0 0
        %866 = vmatprep.subr.bf16.mxu0 0
        %867 = vmatpush1.bf16.msra.mxu0 0
        %868 = vmatprep.subr.bf16.mxu0 0
        %869 = vmatpush1.bf16.msra.mxu0 0
        %870 = vmatprep.subr.bf16.mxu0 0
        %871 = vmatpush1.bf16.msra.mxu0 0
        %872 = vmatprep.subr.bf16.mxu0 0
        %873 = vmatpush1.bf16.msra.mxu0 0
        %874 = vmatprep.subr.bf16.mxu0 0
        %875 = vmatpush1.bf16.msra.mxu0 0
        %876 = vmatprep.mubr.bf16.mxu0 0
        %877 = vmatmul.mubr.bf16.gmra.mrb[0].mxu0 %v838
        %v878 = vpop.f32.mrb[0].mxu0
        %v879 = vadd.f32 0.0, %v878
        %v880 = vpop.f32.mrb[0].mxu0
        %v881 = vpop.f32.mrb[0].mxu0
        %v882 = vpop.f32.mrb[0].mxu0
        %883 = vdwg.mxu0
        %885 = vrot.lane.b32.xlu0 %v771, 120
        %v886 = vpop.permute.xlu0 %885
        %887 = vrot.lane.b32.xlu0 %v772, 88
        %v888 = vpop.permute.xlu0 %887
        %v890 = vsel %vm776, %v886, 0
        %v893 = vsel %vm776, %v888, 0
        %895 = vmatprep.subr.bf16.mxu0 0
        %896 = vmatpush1.bf16.xpose.msra.mxu0 %v893
        %897 = vmatprep.subr.bf16.mxu0 0
        %898 = vmatpush1.bf16.xpose.msra.mxu0 0
        %899 = vmatprep.subr.bf16.mxu0 0
        %900 = vmatpush1.bf16.xpose.msra.mxu0 0
        %901 = vmatprep.subr.bf16.mxu0 0
        %902 = vmatpush1.bf16.xpose.msra.mxu0 0
        %903 = vmatprep.subr.bf16.mxu0 0
        %904 = vmatpush1.bf16.xpose.msra.mxu0 0
        %905 = vmatprep.subr.bf16.mxu0 0
        %906 = vmatpush1.bf16.xpose.msra.mxu0 0
        %907 = vmatprep.subr.bf16.mxu0 0
        %908 = vmatpush1.bf16.xpose.msra.mxu0 0
        %909 = vmatprep.subr.bf16.mxu0 0
        %910 = vmatpush1.bf16.xpose.msra.mxu0 0
        %911 = vmatprep.subr.bf16.mxu0 0
        %912 = vmatpush1.bf16.xpose.msra.mxu0 0
        %913 = vmatprep.subr.bf16.mxu0 0
        %914 = vmatpush1.bf16.xpose.msra.mxu0 0
        %915 = vmatprep.subr.bf16.mxu0 0
        %916 = vmatpush1.bf16.xpose.msra.mxu0 0
        %917 = vmatprep.subr.bf16.mxu0 0
        %918 = vmatpush1.bf16.xpose.msra.mxu0 0
        %919 = vmatprep.subr.bf16.mxu0 0
        %920 = vmatpush1.bf16.xpose.msra.mxu0 0
        %921 = vmatprep.subr.bf16.mxu0 0
        %922 = vmatpush1.bf16.xpose.msra.mxu0 0
        %923 = vmatprep.subr.bf16.mxu0 0
        %924 = vmatpush1.bf16.xpose.msra.mxu0 0
        %925 = vmatprep.subr.bf16.mxu0 0
        %926 = vmatpush1.bf16.xpose.msra.mxu0 0
        %927 = vmatprep.mubr.bf16.mxu0 0
        %928 = vmatmul.mubr.bf16.gmra.mrb[0].mxu0 %v890
        %v929 = vpop.f32.mrb[0].mxu0
        %v930 = vadd.f32 0.0, %v929
        %v931 = vpop.f32.mrb[0].mxu0
        %v932 = vpop.f32.mrb[0].mxu0
        %v933 = vpop.f32.mrb[0].mxu0
        %934 = vdwg.mxu0
        %v935 = vsel %vm776, %v930, -inf
        %936 = vmax.xlane.f32.xlu0 %v935
        %v937 = vpop.xlane.xlu0 %936
        %v938 = vsub.f32 %v930, %v937
        %v939 = vmul.f32 %v938, 1.442695
        %v940 = vpow.pop %v939
        %v941 = vsel %vm776, %v940, 0.0
        %942 = vadd.xlane.f32.xlu0 %v941
        %v943 = vpop.xlane.xlu0 %942
        %v944 = vrcp.pop %v943
        %v945 = vmul.f32 %v940, %v944
        %v946 = vpack.c.bf16 %v945, %v945
        %947 = vrot.lane.b32.xlu0 %v772, 56
        %v948 = vpop.permute.xlu0 %947
        %v950 = vsel %vm776, %v946, 0
        %v953 = vsel %vm840, %v948, 0
        %955 = vmatprep.subr.bf16.mxu0 0
        %956 = vmatpush1.bf16.msra.mxu0 %v953
        %957 = vmatprep.subr.bf16.mxu0 0
        %958 = vmatpush1.bf16.msra.mxu0 0
        %959 = vmatprep.subr.bf16.mxu0 0
        %960 = vmatpush1.bf16.msra.mxu0 0
        %961 = vmatprep.subr.bf16.mxu0 0
        %962 = vmatpush1.bf16.msra.mxu0 0
        %963 = vmatprep.subr.bf16.mxu0 0
        %964 = vmatpush1.bf16.msra.mxu0 0
        %965 = vmatprep.subr.bf16.mxu0 0
        %966 = vmatpush1.bf16.msra.mxu0 0
        %967 = vmatprep.subr.bf16.mxu0 0
        %968 = vmatpush1.bf16.msra.mxu0 0
        %969 = vmatprep.subr.bf16.mxu0 0
        %970 = vmatpush1.bf16.msra.mxu0 0
        %971 = vmatprep.subr.bf16.mxu0 0
        %972 = vmatpush1.bf16.msra.mxu0 0
        %973 = vmatprep.subr.bf16.mxu0 0
        %974 = vmatpush1.bf16.msra.mxu0 0
        %975 = vmatprep.subr.bf16.mxu0 0
        %976 = vmatpush1.bf16.msra.mxu0 0
        %977 = vmatprep.subr.bf16.mxu0 0
        %978 = vmatpush1.bf16.msra.mxu0 0
        %979 = vmatprep.subr.bf16.mxu0 0
        %980 = vmatpush1.bf16.msra.mxu0 0
        %981 = vmatprep.subr.bf16.mxu0 0
        %982 = vmatpush1.bf16.msra.mxu0 0
        %983 = vmatprep.subr.bf16.mxu0 0
        %984 = vmatpush1.bf16.msra.mxu0 0
        %985 = vmatprep.subr.bf16.mxu0 0
        %986 = vmatpush1.bf16.msra.mxu0 0
        %987 = vmatprep.mubr.bf16.mxu0 0
        %988 = vmatmul.mubr.bf16.gmra.mrb[0].mxu0 %v950
        %v989 = vpop.f32.mrb[0].mxu0
        %v990 = vadd.f32 0.0, %v989
        %v991 = vpop.f32.mrb[0].mxu0
        %v992 = vpop.f32.mrb[0].mxu0
        %v993 = vpop.f32.mrb[0].mxu0
        %994 = vdwg.mxu0
        %995 = vrot.lane.b32.xlu0 %v771, 112
        %v996 = vpop.permute.xlu0 %995
        %997 = vrot.lane.b32.xlu0 %v772, 80
        %v998 = vpop.permute.xlu0 %997
        %v1000 = vsel %vm776, %v996, 0
        %v1003 = vsel %vm776, %v998, 0
        %1005 = vmatprep.subr.bf16.mxu0 0
        %1006 = vmatpush1.bf16.xpose.msra.mxu0 %v1003
        %1007 = vmatprep.subr.bf16.mxu0 0
        %1008 = vmatpush1.bf16.xpose.msra.mxu0 0
        %1009 = vmatprep.subr.bf16.mxu0 0
        %1010 = vmatpush1.bf16.xpose.msra.mxu0 0
        %1011 = vmatprep.subr.bf16.mxu0 0
        %1012 = vmatpush1.bf16.xpose.msra.mxu0 0
        %1013 = vmatprep.subr.bf16.mxu0 0
        %1014 = vmatpush1.bf16.xpose.msra.mxu0 0
        %1015 = vmatprep.subr.bf16.mxu0 0
        %1016 = vmatpush1.bf16.xpose.msra.mxu0 0
        %1017 = vmatprep.subr.bf16.mxu0 0
        %1018 = vmatpush1.bf16.xpose.msra.mxu0 0
        %1019 = vmatprep.subr.bf16.mxu0 0
        %1020 = vmatpush1.bf16.xpose.msra.mxu0 0
        %1021 = vmatprep.subr.bf16.mxu0 0
        %1022 = vmatpush1.bf16.xpose.msra.mxu0 0
        %1023 = vmatprep.subr.bf16.mxu0 0
        %1024 = vmatpush1.bf16.xpose.msra.mxu0 0
        %1025 = vmatprep.subr.bf16.mxu0 0
        %1026 = vmatpush1.bf16.xpose.msra.mxu0 0
        %1027 = vmatprep.subr.bf16.mxu0 0
        %1028 = vmatpush1.bf16.xpose.msra.mxu0 0
        %1029 = vmatprep.subr.bf16.mxu0 0
        %1030 = vmatpush1.bf16.xpose.msra.mxu0 0
        %1031 = vmatprep.subr.bf16.mxu0 0
        %1032 = vmatpush1.bf16.xpose.msra.mxu0 0
        %1033 = vmatprep.subr.bf16.mxu0 0
        %1034 = vmatpush1.bf16.xpose.msra.mxu0 0
        %1035 = vmatprep.subr.bf16.mxu0 0
        %1036 = vmatpush1.bf16.xpose.msra.mxu0 0
        %1037 = vmatprep.mubr.bf16.mxu0 0
        %1038 = vmatmul.mubr.bf16.gmra.mrb[0].mxu0 %v1000
        %v1039 = vpop.f32.mrb[0].mxu0
        %v1040 = vadd.f32 0.0, %v1039
        %v1041 = vpop.f32.mrb[0].mxu0
        %v1042 = vpop.f32.mrb[0].mxu0
        %v1043 = vpop.f32.mrb[0].mxu0
        %1044 = vdwg.mxu0
        %v1045 = vsel %vm776, %v1040, -inf
        %1046 = vmax.xlane.f32.xlu0 %v1045
        %v1047 = vpop.xlane.xlu0 %1046
        %v1048 = vsub.f32 %v1040, %v1047
        %v1049 = vmul.f32 %v1048, 1.442695
        %v1050 = vpow.pop %v1049
        %v1051 = vsel %vm776, %v1050, 0.0
        %1052 = vadd.xlane.f32.xlu0 %v1051
        %v1053 = vpop.xlane.xlu0 %1052
        %v1054 = vrcp.pop %v1053
        %v1055 = vmul.f32 %v1050, %v1054
        %v1056 = vpack.c.bf16 %v1055, %v1055
        %1057 = vrot.lane.b32.xlu0 %v772, 48
        %v1058 = vpop.permute.xlu0 %1057
        %v1060 = vsel %vm776, %v1056, 0
        %v1063 = vsel %vm840, %v1058, 0
        %1065 = vmatprep.subr.bf16.mxu0 0
        %1066 = vmatpush1.bf16.msra.mxu0 %v1063
        %1067 = vmatprep.subr.bf16.mxu0 0
        %1068 = vmatpush1.bf16.msra.mxu0 0
        %1069 = vmatprep.subr.bf16.mxu0 0
        %1070 = vmatpush1.bf16.msra.mxu0 0
        %1071 = vmatprep.subr.bf16.mxu0 0
        %1072 = vmatpush1.bf16.msra.mxu0 0
        %1073 = vmatprep.subr.bf16.mxu0 0
        %1074 = vmatpush1.bf16.msra.mxu0 0
        %1075 = vmatprep.subr.bf16.mxu0 0
        %1076 = vmatpush1.bf16.msra.mxu0 0
        %1077 = vmatprep.subr.bf16.mxu0 0
        %1078 = vmatpush1.bf16.msra.mxu0 0
        %1079 = vmatprep.subr.bf16.mxu0 0
        %1080 = vmatpush1.bf16.msra.mxu0 0
        %1081 = vmatprep.subr.bf16.mxu0 0
        %1082 = vmatpush1.bf16.msra.mxu0 0
        %1083 = vmatprep.subr.bf16.mxu0 0
        %1084 = vmatpush1.bf16.msra.mxu0 0
        %1085 = vmatprep.subr.bf16.mxu0 0
        %1086 = vmatpush1.bf16.msra.mxu0 0
        %1087 = vmatprep.subr.bf16.mxu0 0
        %1088 = vmatpush1.bf16.msra.mxu0 0
        %1089 = vmatprep.subr.bf16.mxu0 0
        %1090 = vmatpush1.bf16.msra.mxu0 0
        %1091 = vmatprep.subr.bf16.mxu0 0
        %1092 = vmatpush1.bf16.msra.mxu0 0
        %1093 = vmatprep.subr.bf16.mxu0 0
        %1094 = vmatpush1.bf16.msra.mxu0 0
        %1095 = vmatprep.subr.bf16.mxu0 0
        %1096 = vmatpush1.bf16.msra.mxu0 0
        %1097 = vmatprep.mubr.bf16.mxu0 0
        %1098 = vmatmul.mubr.bf16.gmra.mrb[0].mxu0 %v1060
        %v1099 = vpop.f32.mrb[0].mxu0
        %v1100 = vadd.f32 0.0, %v1099
        %v1101 = vpop.f32.mrb[0].mxu0
        %v1102 = vpop.f32.mrb[0].mxu0
        %v1103 = vpop.f32.mrb[0].mxu0
        %1104 = vdwg.mxu0
        %1105 = vrot.lane.b32.xlu0 %v771, 104
        %v1106 = vpop.permute.xlu0 %1105
        %1107 = vrot.lane.b32.xlu0 %v772, 72
        %v1108 = vpop.permute.xlu0 %1107
        %v1110 = vsel %vm776, %v1106, 0
        %v1113 = vsel %vm776, %v1108, 0
        %1115 = vmatprep.subr.bf16.mxu0 0
        %1116 = vmatpush1.bf16.xpose.msra.mxu0 %v1113
        %1117 = vmatprep.subr.bf16.mxu0 0
        %1118 = vmatpush1.bf16.xpose.msra.mxu0 0
        %1119 = vmatprep.subr.bf16.mxu0 0
        %1120 = vmatpush1.bf16.xpose.msra.mxu0 0
        %1121 = vmatprep.subr.bf16.mxu0 0
        %1122 = vmatpush1.bf16.xpose.msra.mxu0 0
        %1123 = vmatprep.subr.bf16.mxu0 0
        %1124 = vmatpush1.bf16.xpose.msra.mxu0 0
        %1125 = vmatprep.subr.bf16.mxu0 0
        %1126 = vmatpush1.bf16.xpose.msra.mxu0 0
        %1127 = vmatprep.subr.bf16.mxu0 0
        %1128 = vmatpush1.bf16.xpose.msra.mxu0 0
        %1129 = vmatprep.subr.bf16.mxu0 0
        %1130 = vmatpush1.bf16.xpose.msra.mxu0 0
        %1131 = vmatprep.subr.bf16.mxu0 0
        %1132 = vmatpush1.bf16.xpose.msra.mxu0 0
        %1133 = vmatprep.subr.bf16.mxu0 0
        %1134 = vmatpush1.bf16.xpose.msra.mxu0 0
        %1135 = vmatprep.subr.bf16.mxu0 0
        %1136 = vmatpush1.bf16.xpose.msra.mxu0 0
        %1137 = vmatprep.subr.bf16.mxu0 0
        %1138 = vmatpush1.bf16.xpose.msra.mxu0 0
        %1139 = vmatprep.subr.bf16.mxu0 0
        %1140 = vmatpush1.bf16.xpose.msra.mxu0 0
        %1141 = vmatprep.subr.bf16.mxu0 0
        %1142 = vmatpush1.bf16.xpose.msra.mxu0 0
        %1143 = vmatprep.subr.bf16.mxu0 0
        %1144 = vmatpush1.bf16.xpose.msra.mxu0 0
        %1145 = vmatprep.subr.bf16.mxu0 0
        %1146 = vmatpush1.bf16.xpose.msra.mxu0 0
        %1147 = vmatprep.mubr.bf16.mxu0 0
        %1148 = vmatmul.mubr.bf16.gmra.mrb[0].mxu0 %v1110
        %v1149 = vpop.f32.mrb[0].mxu0
        %v1150 = vadd.f32 0.0, %v1149
        %v1151 = vpop.f32.mrb[0].mxu0
        %v1152 = vpop.f32.mrb[0].mxu0
        %v1153 = vpop.f32.mrb[0].mxu0
        %1154 = vdwg.mxu0
        %v1155 = vsel %vm776, %v1150, -inf
        %1156 = vmax.xlane.f32.xlu0 %v1155
        %v1157 = vpop.xlane.xlu0 %1156
        %v1158 = vsub.f32 %v1150, %v1157
        %v1159 = vmul.f32 %v1158, 1.442695
        %v1160 = vpow.pop %v1159
        %v1161 = vsel %vm776, %v1160, 0.0
        %1162 = vadd.xlane.f32.xlu0 %v1161
        %v1163 = vpop.xlane.xlu0 %1162
        %v1164 = vrcp.pop %v1163
        %v1165 = vmul.f32 %v1160, %v1164
        %v1166 = vpack.c.bf16 %v1165, %v1165
        %1167 = vrot.lane.b32.xlu0 %v772, 40
        %v1168 = vpop.permute.xlu0 %1167
        %v1170 = vsel %vm776, %v1166, 0
        %v1173 = vsel %vm840, %v1168, 0
        %1175 = vmatprep.subr.bf16.mxu0 0
        %1176 = vmatpush1.bf16.msra.mxu0 %v1173
        %1177 = vmatprep.subr.bf16.mxu0 0
        %1178 = vmatpush1.bf16.msra.mxu0 0
        %1179 = vmatprep.subr.bf16.mxu0 0
        %1180 = vmatpush1.bf16.msra.mxu0 0
        %1181 = vmatprep.subr.bf16.mxu0 0
        %1182 = vmatpush1.bf16.msra.mxu0 0
        %1183 = vmatprep.subr.bf16.mxu0 0
        %1184 = vmatpush1.bf16.msra.mxu0 0
        %1185 = vmatprep.subr.bf16.mxu0 0
        %1186 = vmatpush1.bf16.msra.mxu0 0
        %1187 = vmatprep.subr.bf16.mxu0 0
        %1188 = vmatpush1.bf16.msra.mxu0 0
        %1189 = vmatprep.subr.bf16.mxu0 0
        %1190 = vmatpush1.bf16.msra.mxu0 0
        %1191 = vmatprep.subr.bf16.mxu0 0
        %1192 = vmatpush1.bf16.msra.mxu0 0
        %1193 = vmatprep.subr.bf16.mxu0 0
        %1194 = vmatpush1.bf16.msra.mxu0 0
        %1195 = vmatprep.subr.bf16.mxu0 0
        %1196 = vmatpush1.bf16.msra.mxu0 0
        %1197 = vmatprep.subr.bf16.mxu0 0
        %1198 = vmatpush1.bf16.msra.mxu0 0
        %1199 = vmatprep.subr.bf16.mxu0 0
        %1200 = vmatpush1.bf16.msra.mxu0 0
        %1201 = vmatprep.subr.bf16.mxu0 0
        %1202 = vmatpush1.bf16.msra.mxu0 0
        %1203 = vmatprep.subr.bf16.mxu0 0
        %1204 = vmatpush1.bf16.msra.mxu0 0
        %1205 = vmatprep.subr.bf16.mxu0 0
        %1206 = vmatpush1.bf16.msra.mxu0 0
        %1207 = vmatprep.mubr.bf16.mxu0 0
        %1208 = vmatmul.mubr.bf16.gmra.mrb[0].mxu0 %v1170
        %v1209 = vpop.f32.mrb[0].mxu0
        %v1210 = vadd.f32 0.0, %v1209
        %v1211 = vpop.f32.mrb[0].mxu0
        %v1212 = vpop.f32.mrb[0].mxu0
        %v1213 = vpop.f32.mrb[0].mxu0
        %1214 = vdwg.mxu0
        %1216 = vrot.lane.b32.xlu0 %v990, 8
        %v1217 = vpop.permute.xlu0 %1216
        %1220 = vrot.lane.b32.xlu0 %v1100, 16
        %v1221 = vpop.permute.xlu0 %1220
        %1224 = vrot.lane.b32.xlu0 %v1210, 24
        %v1225 = vpop.permute.xlu0 %1224
        %v1227 = vsel %vm776, %v879, %v1217
        %vm1228 = vcmask 130048
        %v1229 = vsel %vm1228, %v1227, %v1221
        %vm1230 = vcmask 195584
        %v1231 = vsel %vm1230, %v1229, %v1225
        %v1232 = vrot.slane %v771, 4
        %v1233 = vrot.slane %v772, 4
        %1234 = vrot.lane.b32.xlu0 %v1233, 96
        %v1235 = vpop.permute.xlu0 %1234
        %v1237 = vsel %vm776, %v1232, 0
        %v1240 = vsel %vm776, %v1235, 0
        %1242 = vmatprep.subr.bf16.mxu0 0
        %1243 = vmatpush1.bf16.xpose.msra.mxu0 %v1240
        %1244 = vmatprep.subr.bf16.mxu0 0
        %1245 = vmatpush1.bf16.xpose.msra.mxu0 0
        %1246 = vmatprep.subr.bf16.mxu0 0
        %1247 = vmatpush1.bf16.xpose.msra.mxu0 0
        %1248 = vmatprep.subr.bf16.mxu0 0
        %1249 = vmatpush1.bf16.xpose.msra.mxu0 0
        %1250 = vmatprep.subr.bf16.mxu0 0
        %1251 = vmatpush1.bf16.xpose.msra.mxu0 0
        %1252 = vmatprep.subr.bf16.mxu0 0
        %1253 = vmatpush1.bf16.xpose.msra.mxu0 0
        %1254 = vmatprep.subr.bf16.mxu0 0
        %1255 = vmatpush1.bf16.xpose.msra.mxu0 0
        %1256 = vmatprep.subr.bf16.mxu0 0
        %1257 = vmatpush1.bf16.xpose.msra.mxu0 0
        %1258 = vmatprep.subr.bf16.mxu0 0
        %1259 = vmatpush1.bf16.xpose.msra.mxu0 0
        %1260 = vmatprep.subr.bf16.mxu0 0
        %1261 = vmatpush1.bf16.xpose.msra.mxu0 0
        %1262 = vmatprep.subr.bf16.mxu0 0
        %1263 = vmatpush1.bf16.xpose.msra.mxu0 0
        %1264 = vmatprep.subr.bf16.mxu0 0
        %1265 = vmatpush1.bf16.xpose.msra.mxu0 0
        %1266 = vmatprep.subr.bf16.mxu0 0
        %1267 = vmatpush1.bf16.xpose.msra.mxu0 0
        %1268 = vmatprep.subr.bf16.mxu0 0
        %1269 = vmatpush1.bf16.xpose.msra.mxu0 0
        %1270 = vmatprep.subr.bf16.mxu0 0
        %1271 = vmatpush1.bf16.xpose.msra.mxu0 0
        %1272 = vmatprep.subr.bf16.mxu0 0
        %1273 = vmatpush1.bf16.xpose.msra.mxu0 0
        %1274 = vmatprep.mubr.bf16.mxu0 0
        %1275 = vmatmul.mubr.bf16.gmra.mrb[0].mxu0 %v1237
        %v1276 = vpop.f32.mrb[0].mxu0
        %v1277 = vadd.f32 0.0, %v1276
        %v1278 = vpop.f32.mrb[0].mxu0
        %v1279 = vpop.f32.mrb[0].mxu0
        %v1280 = vpop.f32.mrb[0].mxu0
        %1281 = vdwg.mxu0
        %v1282 = vsel %vm776, %v1277, -inf
        %1283 = vmax.xlane.f32.xlu0 %v1282
        %v1284 = vpop.xlane.xlu0 %1283
        %v1285 = vsub.f32 %v1277, %v1284
        %v1286 = vmul.f32 %v1285, 1.442695
        %v1287 = vpow.pop %v1286
        %v1288 = vsel %vm776, %v1287, 0.0
        %1289 = vadd.xlane.f32.xlu0 %v1288
        %v1290 = vpop.xlane.xlu0 %1289
        %v1291 = vrcp.pop %v1290
        %v1292 = vmul.f32 %v1287, %v1291
        %v1293 = vpack.c.bf16 %v1292, %v1292
        %1294 = vrot.lane.b32.xlu0 %v1233, 64
        %v1295 = vpop.permute.xlu0 %1294
        %v1297 = vsel %vm776, %v1293, 0
        %v1300 = vsel %vm840, %v1295, 0
        %1302 = vmatprep.subr.bf16.mxu0 0
        %1303 = vmatpush1.bf16.msra.mxu0 %v1300
        %1304 = vmatprep.subr.bf16.mxu0 0
        %1305 = vmatpush1.bf16.msra.mxu0 0
        %1306 = vmatprep.subr.bf16.mxu0 0
        %1307 = vmatpush1.bf16.msra.mxu0 0
        %1308 = vmatprep.subr.bf16.mxu0 0
        %1309 = vmatpush1.bf16.msra.mxu0 0
        %1310 = vmatprep.subr.bf16.mxu0 0
        %1311 = vmatpush1.bf16.msra.mxu0 0
        %1312 = vmatprep.subr.bf16.mxu0 0
        %1313 = vmatpush1.bf16.msra.mxu0 0
        %1314 = vmatprep.subr.bf16.mxu0 0
        %1315 = vmatpush1.bf16.msra.mxu0 0
        %1316 = vmatprep.subr.bf16.mxu0 0
        %1317 = vmatpush1.bf16.msra.mxu0 0
        %1318 = vmatprep.subr.bf16.mxu0 0
        %1319 = vmatpush1.bf16.msra.mxu0 0
        %1320 = vmatprep.subr.bf16.mxu0 0
        %1321 = vmatpush1.bf16.msra.mxu0 0
        %1322 = vmatprep.subr.bf16.mxu0 0
        %1323 = vmatpush1.bf16.msra.mxu0 0
        %1324 = vmatprep.subr.bf16.mxu0 0
        %1325 = vmatpush1.bf16.msra.mxu0 0
        %1326 = vmatprep.subr.bf16.mxu0 0
        %1327 = vmatpush1.bf16.msra.mxu0 0
        %1328 = vmatprep.subr.bf16.mxu0 0
        %1329 = vmatpush1.bf16.msra.mxu0 0
        %1330 = vmatprep.subr.bf16.mxu0 0
        %1331 = vmatpush1.bf16.msra.mxu0 0
        %1332 = vmatprep.subr.bf16.mxu0 0
        %1333 = vmatpush1.bf16.msra.mxu0 0
        %1334 = vmatprep.mubr.bf16.mxu0 0
        %1335 = vmatmul.mubr.bf16.gmra.mrb[0].mxu0 %v1297
        %v1336 = vpop.f32.mrb[0].mxu0
        %v1337 = vadd.f32 0.0, %v1336
        %v1338 = vpop.f32.mrb[0].mxu0
        %v1339 = vpop.f32.mrb[0].mxu0
        %v1340 = vpop.f32.mrb[0].mxu0
        %1341 = vdwg.mxu0
        %1342 = vrot.lane.b32.xlu0 %v1232, 120
        %v1343 = vpop.permute.xlu0 %1342
        %1344 = vrot.lane.b32.xlu0 %v1233, 88
        %v1345 = vpop.permute.xlu0 %1344
        %v1347 = vsel %vm776, %v1343, 0
        %v1350 = vsel %vm776, %v1345, 0
        %1352 = vmatprep.subr.bf16.mxu0 0
        %1353 = vmatpush1.bf16.xpose.msra.mxu0 %v1350
        %1354 = vmatprep.subr.bf16.mxu0 0
        %1355 = vmatpush1.bf16.xpose.msra.mxu0 0
        %1356 = vmatprep.subr.bf16.mxu0 0
        %1357 = vmatpush1.bf16.xpose.msra.mxu0 0
        %1358 = vmatprep.subr.bf16.mxu0 0
        %1359 = vmatpush1.bf16.xpose.msra.mxu0 0
        %1360 = vmatprep.subr.bf16.mxu0 0
        %1361 = vmatpush1.bf16.xpose.msra.mxu0 0
        %1362 = vmatprep.subr.bf16.mxu0 0
        %1363 = vmatpush1.bf16.xpose.msra.mxu0 0
        %1364 = vmatprep.subr.bf16.mxu0 0
        %1365 = vmatpush1.bf16.xpose.msra.mxu0 0
        %1366 = vmatprep.subr.bf16.mxu0 0
        %1367 = vmatpush1.bf16.xpose.msra.mxu0 0
        %1368 = vmatprep.subr.bf16.mxu0 0
        %1369 = vmatpush1.bf16.xpose.msra.mxu0 0
        %1370 = vmatprep.subr.bf16.mxu0 0
        %1371 = vmatpush1.bf16.xpose.msra.mxu0 0
        %1372 = vmatprep.subr.bf16.mxu0 0
        %1373 = vmatpush1.bf16.xpose.msra.mxu0 0
        %1374 = vmatprep.subr.bf16.mxu0 0
        %1375 = vmatpush1.bf16.xpose.msra.mxu0 0
        %1376 = vmatprep.subr.bf16.mxu0 0
        %1377 = vmatpush1.bf16.xpose.msra.mxu0 0
        %1378 = vmatprep.subr.bf16.mxu0 0
        %1379 = vmatpush1.bf16.xpose.msra.mxu0 0
        %1380 = vmatprep.subr.bf16.mxu0 0
        %1381 = vmatpush1.bf16.xpose.msra.mxu0 0
        %1382 = vmatprep.subr.bf16.mxu0 0
        %1383 = vmatpush1.bf16.xpose.msra.mxu0 0
        %1384 = vmatprep.mubr.bf16.mxu0 0
        %1385 = vmatmul.mubr.bf16.gmra.mrb[0].mxu0 %v1347
        %v1386 = vpop.f32.mrb[0].mxu0
        %v1387 = vadd.f32 0.0, %v1386
        %v1388 = vpop.f32.mrb[0].mxu0
        %v1389 = vpop.f32.mrb[0].mxu0
        %v1390 = vpop.f32.mrb[0].mxu0
        %1391 = vdwg.mxu0
        %v1392 = vsel %vm776, %v1387, -inf
        %1393 = vmax.xlane.f32.xlu0 %v1392
        %v1394 = vpop.xlane.xlu0 %1393
        %v1395 = vsub.f32 %v1387, %v1394
        %v1396 = vmul.f32 %v1395, 1.442695
        %v1397 = vpow.pop %v1396
        %v1398 = vsel %vm776, %v1397, 0.0
        %1399 = vadd.xlane.f32.xlu0 %v1398
        %v1400 = vpop.xlane.xlu0 %1399
        %v1401 = vrcp.pop %v1400
        %v1402 = vmul.f32 %v1397, %v1401
        %v1403 = vpack.c.bf16 %v1402, %v1402
        %1404 = vrot.lane.b32.xlu0 %v1233, 56
        %v1405 = vpop.permute.xlu0 %1404
        %v1407 = vsel %vm776, %v1403, 0
        %v1410 = vsel %vm840, %v1405, 0
        %1412 = vmatprep.subr.bf16.mxu0 0
        %1413 = vmatpush1.bf16.msra.mxu0 %v1410
        %1414 = vmatprep.subr.bf16.mxu0 0
        %1415 = vmatpush1.bf16.msra.mxu0 0
        %1416 = vmatprep.subr.bf16.mxu0 0
        %1417 = vmatpush1.bf16.msra.mxu0 0
        %1418 = vmatprep.subr.bf16.mxu0 0
        %1419 = vmatpush1.bf16.msra.mxu0 0
        %1420 = vmatprep.subr.bf16.mxu0 0
        %1421 = vmatpush1.bf16.msra.mxu0 0
        %1422 = vmatprep.subr.bf16.mxu0 0
        %1423 = vmatpush1.bf16.msra.mxu0 0
        %1424 = vmatprep.subr.bf16.mxu0 0
        %1425 = vmatpush1.bf16.msra.mxu0 0
        %1426 = vmatprep.subr.bf16.mxu0 0
        %1427 = vmatpush1.bf16.msra.mxu0 0
        %1428 = vmatprep.subr.bf16.mxu0 0
        %1429 = vmatpush1.bf16.msra.mxu0 0
        %1430 = vmatprep.subr.bf16.mxu0 0
        %1431 = vmatpush1.bf16.msra.mxu0 0
        %1432 = vmatprep.subr.bf16.mxu0 0
        %1433 = vmatpush1.bf16.msra.mxu0 0
        %1434 = vmatprep.subr.bf16.mxu0 0
        %1435 = vmatpush1.bf16.msra.mxu0 0
        %1436 = vmatprep.subr.bf16.mxu0 0
        %1437 = vmatpush1.bf16.msra.mxu0 0
        %1438 = vmatprep.subr.bf16.mxu0 0
        %1439 = vmatpush1.bf16.msra.mxu0 0
        %1440 = vmatprep.subr.bf16.mxu0 0
        %1441 = vmatpush1.bf16.msra.mxu0 0
        %1442 = vmatprep.subr.bf16.mxu0 0
        %1443 = vmatpush1.bf16.msra.mxu0 0
        %1444 = vmatprep.mubr.bf16.mxu0 0
        %1445 = vmatmul.mubr.bf16.gmra.mrb[0].mxu0 %v1407
        %v1446 = vpop.f32.mrb[0].mxu0
        %v1447 = vadd.f32 0.0, %v1446
        %v1448 = vpop.f32.mrb[0].mxu0
        %v1449 = vpop.f32.mrb[0].mxu0
        %v1450 = vpop.f32.mrb[0].mxu0
        %1451 = vdwg.mxu0
        %1452 = vrot.lane.b32.xlu0 %v1232, 112
        %v1453 = vpop.permute.xlu0 %1452
        %1454 = vrot.lane.b32.xlu0 %v1233, 80
        %v1455 = vpop.permute.xlu0 %1454
        %v1457 = vsel %vm776, %v1453, 0
        %v1460 = vsel %vm776, %v1455, 0
        %1462 = vmatprep.subr.bf16.mxu0 0
        %1463 = vmatpush1.bf16.xpose.msra.mxu0 %v1460
        %1464 = vmatprep.subr.bf16.mxu0 0
        %1465 = vmatpush1.bf16.xpose.msra.mxu0 0
        %1466 = vmatprep.subr.bf16.mxu0 0
        %1467 = vmatpush1.bf16.xpose.msra.mxu0 0
        %1468 = vmatprep.subr.bf16.mxu0 0
        %1469 = vmatpush1.bf16.xpose.msra.mxu0 0
        %1470 = vmatprep.subr.bf16.mxu0 0
        %1471 = vmatpush1.bf16.xpose.msra.mxu0 0
        %1472 = vmatprep.subr.bf16.mxu0 0
        %1473 = vmatpush1.bf16.xpose.msra.mxu0 0
        %1474 = vmatprep.subr.bf16.mxu0 0
        %1475 = vmatpush1.bf16.xpose.msra.mxu0 0
        %1476 = vmatprep.subr.bf16.mxu0 0
        %1477 = vmatpush1.bf16.xpose.msra.mxu0 0
        %1478 = vmatprep.subr.bf16.mxu0 0
        %1479 = vmatpush1.bf16.xpose.msra.mxu0 0
        %1480 = vmatprep.subr.bf16.mxu0 0
        %1481 = vmatpush1.bf16.xpose.msra.mxu0 0
        %1482 = vmatprep.subr.bf16.mxu0 0
        %1483 = vmatpush1.bf16.xpose.msra.mxu0 0
        %1484 = vmatprep.subr.bf16.mxu0 0
        %1485 = vmatpush1.bf16.xpose.msra.mxu0 0
        %1486 = vmatprep.subr.bf16.mxu0 0
        %1487 = vmatpush1.bf16.xpose.msra.mxu0 0
        %1488 = vmatprep.subr.bf16.mxu0 0
        %1489 = vmatpush1.bf16.xpose.msra.mxu0 0
        %1490 = vmatprep.subr.bf16.mxu0 0
        %1491 = vmatpush1.bf16.xpose.msra.mxu0 0
        %1492 = vmatprep.subr.bf16.mxu0 0
        %1493 = vmatpush1.bf16.xpose.msra.mxu0 0
        %1494 = vmatprep.mubr.bf16.mxu0 0
        %1495 = vmatmul.mubr.bf16.gmra.mrb[0].mxu0 %v1457
        %v1496 = vpop.f32.mrb[0].mxu0
        %v1497 = vadd.f32 0.0, %v1496
        %v1498 = vpop.f32.mrb[0].mxu0
        %v1499 = vpop.f32.mrb[0].mxu0
        %v1500 = vpop.f32.mrb[0].mxu0
        %1501 = vdwg.mxu0
        %v1502 = vsel %vm776, %v1497, -inf
        %1503 = vmax.xlane.f32.xlu0 %v1502
        %v1504 = vpop.xlane.xlu0 %1503
        %v1505 = vsub.f32 %v1497, %v1504
        %v1506 = vmul.f32 %v1505, 1.442695
        %v1507 = vpow.pop %v1506
        %v1508 = vsel %vm776, %v1507, 0.0
        %1509 = vadd.xlane.f32.xlu0 %v1508
        %v1510 = vpop.xlane.xlu0 %1509
        %v1511 = vrcp.pop %v1510
        %v1512 = vmul.f32 %v1507, %v1511
        %v1513 = vpack.c.bf16 %v1512, %v1512
        %1514 = vrot.lane.b32.xlu0 %v1233, 48
        %v1515 = vpop.permute.xlu0 %1514
        %v1517 = vsel %vm776, %v1513, 0
        %v1520 = vsel %vm840, %v1515, 0
        %1522 = vmatprep.subr.bf16.mxu0 0
        %1523 = vmatpush1.bf16.msra.mxu0 %v1520
        %1524 = vmatprep.subr.bf16.mxu0 0
        %1525 = vmatpush1.bf16.msra.mxu0 0
        %1526 = vmatprep.subr.bf16.mxu0 0
        %1527 = vmatpush1.bf16.msra.mxu0 0
        %1528 = vmatprep.subr.bf16.mxu0 0
        %1529 = vmatpush1.bf16.msra.mxu0 0
        %1530 = vmatprep.subr.bf16.mxu0 0
        %1531 = vmatpush1.bf16.msra.mxu0 0
        %1532 = vmatprep.subr.bf16.mxu0 0
        %1533 = vmatpush1.bf16.msra.mxu0 0
        %1534 = vmatprep.subr.bf16.mxu0 0
        %1535 = vmatpush1.bf16.msra.mxu0 0
        %1536 = vmatprep.subr.bf16.mxu0 0
        %1537 = vmatpush1.bf16.msra.mxu0 0
        %1538 = vmatprep.subr.bf16.mxu0 0
        %1539 = vmatpush1.bf16.msra.mxu0 0
        %1540 = vmatprep.subr.bf16.mxu0 0
        %1541 = vmatpush1.bf16.msra.mxu0 0
        %1542 = vmatprep.subr.bf16.mxu0 0
        %1543 = vmatpush1.bf16.msra.mxu0 0
        %1544 = vmatprep.subr.bf16.mxu0 0
        %1545 = vmatpush1.bf16.msra.mxu0 0
        %1546 = vmatprep.subr.bf16.mxu0 0
        %1547 = vmatpush1.bf16.msra.mxu0 0
        %1548 = vmatprep.subr.bf16.mxu0 0
        %1549 = vmatpush1.bf16.msra.mxu0 0
        %1550 = vmatprep.subr.bf16.mxu0 0
        %1551 = vmatpush1.bf16.msra.mxu0 0
        %1552 = vmatprep.subr.bf16.mxu0 0
        %1553 = vmatpush1.bf16.msra.mxu0 0
        %1554 = vmatprep.mubr.bf16.mxu0 0
        %1555 = vmatmul.mubr.bf16.gmra.mrb[0].mxu0 %v1517
        %v1556 = vpop.f32.mrb[0].mxu0
        %v1557 = vadd.f32 0.0, %v1556
        %v1558 = vpop.f32.mrb[0].mxu0
        %v1559 = vpop.f32.mrb[0].mxu0
        %v1560 = vpop.f32.mrb[0].mxu0
        %1561 = vdwg.mxu0
        %1562 = vrot.lane.b32.xlu0 %v1232, 104
        %v1563 = vpop.permute.xlu0 %1562
        %1564 = vrot.lane.b32.xlu0 %v1233, 72
        %v1565 = vpop.permute.xlu0 %1564
        %v1567 = vsel %vm776, %v1563, 0
        %v1570 = vsel %vm776, %v1565, 0
        %1572 = vmatprep.subr.bf16.mxu0 0
        %1573 = vmatpush1.bf16.xpose.msra.mxu0 %v1570
        %1574 = vmatprep.subr.bf16.mxu0 0
        %1575 = vmatpush1.bf16.xpose.msra.mxu0 0
        %1576 = vmatprep.subr.bf16.mxu0 0
        %1577 = vmatpush1.bf16.xpose.msra.mxu0 0
        %1578 = vmatprep.subr.bf16.mxu0 0
        %1579 = vmatpush1.bf16.xpose.msra.mxu0 0
        %1580 = vmatprep.subr.bf16.mxu0 0
        %1581 = vmatpush1.bf16.xpose.msra.mxu0 0
        %1582 = vmatprep.subr.bf16.mxu0 0
        %1583 = vmatpush1.bf16.xpose.msra.mxu0 0
        %1584 = vmatprep.subr.bf16.mxu0 0
        %1585 = vmatpush1.bf16.xpose.msra.mxu0 0
        %1586 = vmatprep.subr.bf16.mxu0 0
        %1587 = vmatpush1.bf16.xpose.msra.mxu0 0
        %1588 = vmatprep.subr.bf16.mxu0 0
        %1589 = vmatpush1.bf16.xpose.msra.mxu0 0
        %1590 = vmatprep.subr.bf16.mxu0 0
        %1591 = vmatpush1.bf16.xpose.msra.mxu0 0
        %1592 = vmatprep.subr.bf16.mxu0 0
        %1593 = vmatpush1.bf16.xpose.msra.mxu0 0
        %1594 = vmatprep.subr.bf16.mxu0 0
        %1595 = vmatpush1.bf16.xpose.msra.mxu0 0
        %1596 = vmatprep.subr.bf16.mxu0 0
        %1597 = vmatpush1.bf16.xpose.msra.mxu0 0
        %1598 = vmatprep.subr.bf16.mxu0 0
        %1599 = vmatpush1.bf16.xpose.msra.mxu0 0
        %1600 = vmatprep.subr.bf16.mxu0 0
        %1601 = vmatpush1.bf16.xpose.msra.mxu0 0
        %1602 = vmatprep.subr.bf16.mxu0 0
        %1603 = vmatpush1.bf16.xpose.msra.mxu0 0
        %1604 = vmatprep.mubr.bf16.mxu0 0
        %1605 = vmatmul.mubr.bf16.gmra.mrb[0].mxu0 %v1567
        %v1606 = vpop.f32.mrb[0].mxu0
        %v1607 = vadd.f32 0.0, %v1606
        %v1608 = vpop.f32.mrb[0].mxu0
        %v1609 = vpop.f32.mrb[0].mxu0
        %v1610 = vpop.f32.mrb[0].mxu0
        %1611 = vdwg.mxu0
        %v1612 = vsel %vm776, %v1607, -inf
        %1613 = vmax.xlane.f32.xlu0 %v1612
        %v1614 = vpop.xlane.xlu0 %1613
        %v1615 = vsub.f32 %v1607, %v1614
        %v1616 = vmul.f32 %v1615, 1.442695
        %v1617 = vpow.pop %v1616
        %v1618 = vsel %vm776, %v1617, 0.0
        %1619 = vadd.xlane.f32.xlu0 %v1618
        %v1620 = vpop.xlane.xlu0 %1619
        %v1621 = vrcp.pop %v1620
        %v1622 = vmul.f32 %v1617, %v1621
        %v1623 = vpack.c.bf16 %v1622, %v1622
        %1624 = vrot.lane.b32.xlu0 %v1233, 40
        %v1625 = vpop.permute.xlu0 %1624
        %v1627 = vsel %vm776, %v1623, 0
        %v1630 = vsel %vm840, %v1625, 0
        %1632 = vmatprep.subr.bf16.mxu0 0
        %1633 = vmatpush1.bf16.msra.mxu0 %v1630
        %1634 = vmatprep.subr.bf16.mxu0 0
        %1635 = vmatpush1.bf16.msra.mxu0 0
        %1636 = vmatprep.subr.bf16.mxu0 0
        %1637 = vmatpush1.bf16.msra.mxu0 0
        %1638 = vmatprep.subr.bf16.mxu0 0
        %1639 = vmatpush1.bf16.msra.mxu0 0
        %1640 = vmatprep.subr.bf16.mxu0 0
        %1641 = vmatpush1.bf16.msra.mxu0 0
        %1642 = vmatprep.subr.bf16.mxu0 0
        %1643 = vmatpush1.bf16.msra.mxu0 0
        %1644 = vmatprep.subr.bf16.mxu0 0
        %1645 = vmatpush1.bf16.msra.mxu0 0
        %1646 = vmatprep.subr.bf16.mxu0 0
        %1647 = vmatpush1.bf16.msra.mxu0 0
        %1648 = vmatprep.subr.bf16.mxu0 0
        %1649 = vmatpush1.bf16.msra.mxu0 0
        %1650 = vmatprep.subr.bf16.mxu0 0
        %1651 = vmatpush1.bf16.msra.mxu0 0
        %1652 = vmatprep.subr.bf16.mxu0 0
        %1653 = vmatpush1.bf16.msra.mxu0 0
        %1654 = vmatprep.subr.bf16.mxu0 0
        %1655 = vmatpush1.bf16.msra.mxu0 0
        %1656 = vmatprep.subr.bf16.mxu0 0
        %1657 = vmatpush1.bf16.msra.mxu0 0
        %1658 = vmatprep.subr.bf16.mxu0 0
        %1659 = vmatpush1.bf16.msra.mxu0 0
        %1660 = vmatprep.subr.bf16.mxu0 0
        %1661 = vmatpush1.bf16.msra.mxu0 0
        %1662 = vmatprep.subr.bf16.mxu0 0
        %1663 = vmatpush1.bf16.msra.mxu0 0
        %1664 = vmatprep.mubr.bf16.mxu0 0
        %1665 = vmatmul.mubr.bf16.gmra.mrb[0].mxu0 %v1627
        %v1666 = vpop.f32.mrb[0].mxu0
        %v1667 = vadd.f32 0.0, %v1666
        %v1668 = vpop.f32.mrb[0].mxu0
        %v1669 = vpop.f32.mrb[0].mxu0
        %v1670 = vpop.f32.mrb[0].mxu0
        %1671 = vdwg.mxu0
        %1673 = vrot.lane.b32.xlu0 %v1447, 8
        %v1674 = vpop.permute.xlu0 %1673
        %1677 = vrot.lane.b32.xlu0 %v1557, 16
        %v1678 = vpop.permute.xlu0 %1677
        %1681 = vrot.lane.b32.xlu0 %v1667, 24
        %v1682 = vpop.permute.xlu0 %1681
        %v1684 = vsel %vm776, %v1337, %v1674
        %v1685 = vsel %vm1228, %v1684, %v1678
        %v1686 = vsel %vm1230, %v1685, %v1682
        %v1687 = vpack.c.bf16 %v1686, %v1231
        %v1688 = vld [vmem:[%s668] sm:$0xf]
        %v1689 = vld [vmem:[%s668 + $0x4] sm:$0xf]
        %v1690 = vld [vmem:[%s668 + $0x8] sm:$0xf]
        %v1691 = vld [vmem:[%s668 + $0xc] sm:$0xf]
        %v1692 = vld [vmem:[%s551] sm:$0x1]
        %v1694 = vlaneseq
        %v1695 = vshrl.u32 %v1694, 7
        %v1696 = vsub.s32 0, %v1695
        %v1697 = vrot.slane %v1692, %v1696
        %v1703 = vunpack.c.l.b16 %v1688
        %v1704 = vunpack.c.l.b16 %v1689
        %v1705 = vunpack.c.l.b16 %v1690
        %v1706 = vunpack.c.l.b16 %v1691
        %v1707 = vpack.c.b16 %v1704, %v1703
        %v1708 = vpack.c.b16 %v1706, %v1705
        %v1712 = vsel %vm724, %v1687, 0
        %1714 = vmatprep.subr.bf16.mxu0 0
        %1715 = vmatpush1.bf16.msra.mxu0 %v1707
        %1716 = vmatprep.subr.bf16.mxu0 0
        %1717 = vmatpush1.bf16.msra.mxu0 %v1708
        %1718 = vmatprep.subr.bf16.mxu0 0
        %1719 = vmatpush1.bf16.msra.mxu0 0
        %1720 = vmatprep.subr.bf16.mxu0 0
        %1721 = vmatpush1.bf16.msra.mxu0 0
        %1722 = vmatprep.subr.bf16.mxu0 0
        %1723 = vmatpush1.bf16.msra.mxu0 0
        %1724 = vmatprep.subr.bf16.mxu0 0
        %1725 = vmatpush1.bf16.msra.mxu0 0
        %1726 = vmatprep.subr.bf16.mxu0 0
        %1727 = vmatpush1.bf16.msra.mxu0 0
        %1728 = vmatprep.subr.bf16.mxu0 0
        %1729 = vmatpush1.bf16.msra.mxu0 0
        %1730 = vmatprep.subr.bf16.mxu0 0
        %1731 = vmatpush1.bf16.msra.mxu0 0
        %1732 = vmatprep.subr.bf16.mxu0 0
        %1733 = vmatpush1.bf16.msra.mxu0 0
        %1734 = vmatprep.subr.bf16.mxu0 0
        %1735 = vmatpush1.bf16.msra.mxu0 0
        %1736 = vmatprep.subr.bf16.mxu0 0
        %1737 = vmatpush1.bf16.msra.mxu0 0
        %1738 = vmatprep.subr.bf16.mxu0 0
        %1739 = vmatpush1.bf16.msra.mxu0 0
        %1740 = vmatprep.subr.bf16.mxu0 0
        %1741 = vmatpush1.bf16.msra.mxu0 0
        %1742 = vmatprep.subr.bf16.mxu0 0
        %1743 = vmatpush1.bf16.msra.mxu0 0
        %1744 = vmatprep.subr.bf16.mxu0 0
        %1745 = vmatpush1.bf16.msra.mxu0 0
        %1746 = vmatprep.mubr.bf16.mxu0 0
        %1747 = vmatmul.mubr.bf16.gmra.mrb[0].mxu0 %v1712
        %v1748 = vpop.f32.mrb[0].mxu0
        %v1749 = vadd.f32 %v1697, %v1748
        %v1750 = vpop.f32.mrb[0].mxu0
        %v1751 = vpop.f32.mrb[0].mxu0
        %v1752 = vadd.f32 %v1697, %v1751
        %v1753 = vpop.f32.mrb[0].mxu0
        %1754 = vdwg.mxu0
        %v1755 = vadd.f32 %v698, %v1749
        %v1756 = vadd.f32 %v699, %v1752
        %v1757 = vld [vmem:[%s559] sm:$0x1]
        %v1758 = vld [vmem:[%s567] sm:$0x1]
        %v1759 = vsel %vm724, %v1755, 0.0
        %1760 = vadd.xlane.f32.xlu0 %v1759
        %v1761 = vpop.xlane.xlu0 %1760
        %v1762 = vsel %vm724, %v1756, 0.0
        %1763 = vadd.xlane.f32.xlu0 %v1762
        %v1764 = vpop.xlane.xlu0 %1763
        %v1765 = vrcp.pop 32.0
        %v1766 = vmul.f32 %v1761, %v1765
        %v1767 = vmul.f32 %v1764, %v1765
        %v1768 = vsub.f32 %v1755, %v1766
        %v1769 = vsub.f32 %v1756, %v1767
        %v1770 = vmul.f32 %v1768, %v1768
        %v1771 = vmul.f32 %v1769, %v1769
        %v1772 = vsel %vm724, %v1770, 0.0
        %1773 = vadd.xlane.f32.xlu0 %v1772
        %v1774 = vpop.xlane.xlu0 %1773
        %v1775 = vsel %vm724, %v1771, 0.0
        %1776 = vadd.xlane.f32.xlu0 %v1775
        %v1777 = vpop.xlane.xlu0 %1776
        %v1778 = vmul.f32 %v1774, %v1765
        %v1779 = vmul.f32 %v1777, %v1765
        %v1780 = vadd.f32 %v1778, 1e-05
        %v1781 = vadd.f32 %v1779, 1e-05
        %v1782 = vrsqrt.pop %v1780
        %v1783 = vrsqrt.pop %v1781
        %v1784 = vmul.f32 %v1768, %v1782
        %v1785 = vmul.f32 %v1769, %v1783
        %v1787 = vlaneseq
        %v1788 = vshrl.u32 %v1787, 7
        %v1789 = vsub.s32 0, %v1788
        %v1790 = vrot.slane %v1757, %v1789
        %v1792 = vmul.f32 %v1784, %v1790
        %v1793 = vmul.f32 %v1785, %v1790
        %v1795 = vlaneseq
        %v1796 = vshrl.u32 %v1795, 7
        %v1797 = vsub.s32 0, %v1796
        %v1798 = vrot.slane %v1758, %v1797
        %v1800 = vadd.f32 %v1792, %v1798
        %v1801 = vadd.f32 %v1793, %v1798
        %v1802 = vpack.c.bf16 %v1801, %v1800
        %v1803 = vld [vmem:[%s673] sm:$0xf]
        %v1804 = vld [vmem:[%s673 + $0x4] sm:$0xf]
        %v1805 = vld [vmem:[%s673 + $0x8] sm:$0xf]
        %v1806 = vld [vmem:[%s673 + $0xc] sm:$0xf]
        %v1807 = vld [vmem:[%s575] sm:$0x1]
        %v1809 = vlaneseq
        %v1810 = vshrl.u32 %v1809, 7
        %v1811 = vsub.s32 0, %v1810
        %v1812 = vrot.slane %v1807, %v1811
        %v1818 = vunpack.c.l.b16 %v1803
        %v1819 = vunpack.c.l.b16 %v1804
        %v1820 = vunpack.c.l.b16 %v1805
        %v1821 = vunpack.c.l.b16 %v1806
        %v1822 = vpack.c.b16 %v1819, %v1818
        %v1823 = vpack.c.b16 %v1821, %v1820
        %v1827 = vsel %vm724, %v1802, 0
        %1829 = vmatprep.subr.bf16.mxu0 0
        %1830 = vmatpush1.bf16.msra.mxu0 %v1822
        %1831 = vmatprep.subr.bf16.mxu0 0
        %1832 = vmatpush1.bf16.msra.mxu0 %v1823
        %1833 = vmatprep.subr.bf16.mxu0 0
        %1834 = vmatpush1.bf16.msra.mxu0 0
        %1835 = vmatprep.subr.bf16.mxu0 0
        %1836 = vmatpush1.bf16.msra.mxu0 0
        %1837 = vmatprep.subr.bf16.mxu0 0
        %1838 = vmatpush1.bf16.msra.mxu0 0
        %1839 = vmatprep.subr.bf16.mxu0 0
        %1840 = vmatpush1.bf16.msra.mxu0 0
        %1841 = vmatprep.subr.bf16.mxu0 0
        %1842 = vmatpush1.bf16.msra.mxu0 0
        %1843 = vmatprep.subr.bf16.mxu0 0
        %1844 = vmatpush1.bf16.msra.mxu0 0
        %1845 = vmatprep.subr.bf16.mxu0 0
        %1846 = vmatpush1.bf16.msra.mxu0 0
        %1847 = vmatprep.subr.bf16.mxu0 0
        %1848 = vmatpush1.bf16.msra.mxu0 0
        %1849 = vmatprep.subr.bf16.mxu0 0
        %1850 = vmatpush1.bf16.msra.mxu0 0
        %1851 = vmatprep.subr.bf16.mxu0 0
        %1852 = vmatpush1.bf16.msra.mxu0 0
        %1853 = vmatprep.subr.bf16.mxu0 0
        %1854 = vmatpush1.bf16.msra.mxu0 0
        %1855 = vmatprep.subr.bf16.mxu0 0
        %1856 = vmatpush1.bf16.msra.mxu0 0
        %1857 = vmatprep.subr.bf16.mxu0 0
        %1858 = vmatpush1.bf16.msra.mxu0 0
        %1859 = vmatprep.subr.bf16.mxu0 0
        %1860 = vmatpush1.bf16.msra.mxu0 0
        %1861 = vmatprep.mubr.bf16.mxu0 0
        %1862 = vmatmul.mubr.bf16.gmra.mrb[0].mxu0 %v1827
        %v1863 = vpop.f32.mrb[0].mxu0
        %v1864 = vadd.f32 %v1812, %v1863
        %v1865 = vpop.f32.mrb[0].mxu0
        %v1866 = vpop.f32.mrb[0].mxu0
        %v1867 = vadd.f32 %v1812, %v1866
        %v1868 = vpop.f32.mrb[0].mxu0
        %1869 = vdwg.mxu0
        %v1870 = vmax.f32 %v1864, 0.0
        %v1871 = vmax.f32 %v1867, 0.0
        %v1872 = vpack.c.bf16 %v1871, %v1870
        %v1873 = vld [vmem:[%s678] sm:$0xf]
        %v1874 = vld [vmem:[%s678 + $0x4] sm:$0xf]
        %v1875 = vld [vmem:[%s678 + $0x8] sm:$0xf]
        %v1876 = vld [vmem:[%s678 + $0xc] sm:$0xf]
        %v1877 = vld [vmem:[%s678 + $0x10] sm:$0xf]
        %v1878 = vld [vmem:[%s678 + $0x14] sm:$0xf]
        %v1879 = vld [vmem:[%s678 + $0x18] sm:$0xf]
        %v1880 = vld [vmem:[%s678 + $0x1c] sm:$0xf]
        %v1881 = vld [vmem:[%s681] sm:$0x1]
        %v1883 = vlaneseq
        %v1884 = vshrl.u32 %v1883, 7
        %v1885 = vsub.s32 0, %v1884
        %v1886 = vrot.slane %v1881, %v1885
        %v1896 = vunpack.c.l.b16 %v1873
        %v1897 = vunpack.c.l.b16 %v1874
        %v1898 = vunpack.c.l.b16 %v1875
        %v1899 = vunpack.c.l.b16 %v1876
        %v1900 = vunpack.c.l.b16 %v1877
        %v1901 = vunpack.c.l.b16 %v1878
        %v1902 = vunpack.c.l.b16 %v1879
        %v1903 = vunpack.c.l.b16 %v1880
        %v1904 = vpack.c.b16 %v1897, %v1896
        %v1905 = vpack.c.b16 %v1899, %v1898
        %v1906 = vpack.c.b16 %v1901, %v1900
        %v1907 = vpack.c.b16 %v1903, %v1902
        %vm1912 = vcmask 523264
        %v1914 = vsel %vm1912, %v1872, 0
        %1916 = vmatprep.subr.bf16.mxu0 0
        %1917 = vmatpush1.bf16.msra.mxu0 %v1904
        %1918 = vmatprep.subr.bf16.mxu0 0
        %1919 = vmatpush1.bf16.msra.mxu0 %v1905
        %1920 = vmatprep.subr.bf16.mxu0 0
        %1921 = vmatpush1.bf16.msra.mxu0 %v1906
        %1922 = vmatprep.subr.bf16.mxu0 0
        %1923 = vmatpush1.bf16.msra.mxu0 %v1907
        %1924 = vmatprep.subr.bf16.mxu0 0
        %1925 = vmatpush1.bf16.msra.mxu0 0
        %1926 = vmatprep.subr.bf16.mxu0 0
        %1927 = vmatpush1.bf16.msra.mxu0 0
        %1928 = vmatprep.subr.bf16.mxu0 0
        %1929 = vmatpush1.bf16.msra.mxu0 0
        %1930 = vmatprep.subr.bf16.mxu0 0
        %1931 = vmatpush1.bf16.msra.mxu0 0
        %1932 = vmatprep.subr.bf16.mxu0 0
        %1933 = vmatpush1.bf16.msra.mxu0 0
        %1934 = vmatprep.subr.bf16.mxu0 0
        %1935 = vmatpush1.bf16.msra.mxu0 0
        %1936 = vmatprep.subr.bf16.mxu0 0
        %1937 = vmatpush1.bf16.msra.mxu0 0
        %1938 = vmatprep.subr.bf16.mxu0 0
        %1939 = vmatpush1.bf16.msra.mxu0 0
        %1940 = vmatprep.subr.bf16.mxu0 0
        %1941 = vmatpush1.bf16.msra.mxu0 0
        %1942 = vmatprep.subr.bf16.mxu0 0
        %1943 = vmatpush1.bf16.msra.mxu0 0
        %1944 = vmatprep.subr.bf16.mxu0 0
        %1945 = vmatpush1.bf16.msra.mxu0 0
        %1946 = vmatprep.subr.bf16.mxu0 0
        %1947 = vmatpush1.bf16.msra.mxu0 0
        %1948 = vmatprep.mubr.bf16.mxu0 0
        %1949 = vmatmul.mubr.bf16.gmra.mrb[0].mxu0 %v1914
        %v1950 = vpop.f32.mrb[0].mxu0
        %v1951 = vadd.f32 %v1886, %v1950
        %v1952 = vpop.f32.mrb[0].mxu0
        %v1953 = vpop.f32.mrb[0].mxu0
        %v1954 = vadd.f32 %v1886, %v1953
        %v1955 = vpop.f32.mrb[0].mxu0
        %1956 = vdwg.mxu0
        %v1957 = vadd.f32 %v1800, %v1951
        %v1958 = vadd.f32 %v1801, %v1954
        %v1959 = vld [vmem:[%s684] sm:$0x1]
        %v1960 = vld [vmem:[%s687] sm:$0x1]
        %v1961 = vsel %vm724, %v1957, 0.0
        %1962 = vadd.xlane.f32.xlu0 %v1961
        %v1963 = vpop.xlane.xlu0 %1962
        %v1964 = vsel %vm724, %v1958, 0.0
        %1965 = vadd.xlane.f32.xlu0 %v1964
        %v1966 = vpop.xlane.xlu0 %1965
        %v1967 = vmul.f32 %v1963, %v1765
        %v1968 = vmul.f32 %v1966, %v1765
        %v1969 = vsub.f32 %v1957, %v1967
        %v1970 = vsub.f32 %v1958, %v1968
        %v1971 = vmul.f32 %v1969, %v1969
        %v1972 = vmul.f32 %v1970, %v1970
        %v1973 = vsel %vm724, %v1971, 0.0
        %1974 = vadd.xlane.f32.xlu0 %v1973
        %v1975 = vpop.xlane.xlu0 %1974
        %v1976 = vsel %vm724, %v1972, 0.0
        %1977 = vadd.xlane.f32.xlu0 %v1976
        %v1978 = vpop.xlane.xlu0 %1977
        %v1979 = vmul.f32 %v1975, %v1765
        %v1980 = vmul.f32 %v1978, %v1765
        %v1981 = vadd.f32 %v1979, 1e-05
        %v1982 = vadd.f32 %v1980, 1e-05
        %v1983 = vrsqrt.pop %v1981
        %v1984 = vrsqrt.pop %v1982
        %v1985 = vmul.f32 %v1969, %v1983
        %v1986 = vmul.f32 %v1970, %v1984
        %v1988 = vlaneseq
        %v1989 = vshrl.u32 %v1988, 7
        %v1990 = vsub.s32 0, %v1989
        %v1991 = vrot.slane %v1959, %v1990
        %v1993 = vmul.f32 %v1985, %v1991
        %v1994 = vmul.f32 %v1986, %v1991
        %v1996 = vlaneseq
        %v1997 = vshrl.u32 %v1996, 7
        %v1998 = vsub.s32 0, %v1997
        %v1999 = vrot.slane %v1960, %v1998
        %v2001 = vadd.f32 %v1993, %v1999
        %v2002 = vadd.f32 %v1994, %v1999
        %2003 = vst.msk [vmem:[#allocation2] sm:$0xff] %vm724, %v2001
        %2004 = vst.msk [vmem:[#allocation2 + $0x8] sm:$0xff] %vm724, %v2002
        %p2005 = scmp.eq.s32.totalorder %s32, 1
        // Predicated region
        $region97: #{tpu_custom_call.1} parent=71 // pred_check
          %p2006 = pneg %p2005
        $region98: #{tpu_custom_call.1} parent=71 // pred_check_branch
          %2008 = sbr.rel (%p2006) target = $region100
        $region99: #{tpu_custom_call.1} parent=71 // pred_region
          %v2009 = vld [vmem:[#allocation2] sm:$0xff]
          %v2010 = vld [vmem:[#allocation2 + $0x8] sm:$0xff]
          %2011 = vst.msk [vmem:[#allocation12] sm:$0xff] %vm724, %v2009
          %2012 = vst.msk [vmem:[#allocation12 + $0x8] sm:$0xff] %vm724, %v2010
        $region100: #{tpu_custom_call.1} parent=71 // pred_fallthru
          _
        // Predicated region
        $region101: #{tpu_custom_call.1} parent=71 // pred_check
          %p2013 = pneg %p378
        $region102: #{tpu_custom_call.1} parent=71 // pred_check_branch
          %2015 = sbr.rel (%p2013) target = $region104
        $region103: #{tpu_custom_call.1} parent=71 // pred_region
          %s2017 = ssub.s32 256, 256
          %2018 = vsyncadd [#allocation5], %s2017
          %s2019 = sshll.u32 [#allocation12], 4
          %s2020 = int_to_ptr.vmem [resolvable:$true] %s2019
          %2025 = dma.vmem_to_hbm [thread:$0]  %s2020, 256, %s13, [#allocation5], 128, 128, 8
        $region104: #{tpu_custom_call.1} parent=71 // pred_fallthru
          _
        // Predicated region
        $region105: #{tpu_custom_call.1} parent=71 // pred_check
          %p2026 = pneg %p378
        $region106: #{tpu_custom_call.1} parent=71 // pred_check_branch
          %2028 = sbr.rel (%p2026) target = $region108
        $region107: #{tpu_custom_call.1} parent=71 // pred_region
          %2029 = dma.done [#allocation5], 256
        $region108: #{tpu_custom_call.1} parent=71 // pred_fallthru
          _
      $region72: #{tpu_custom_call.1} parent=5 // pred_fallthru
        _
      %p2030 = scmp.le.s32.totalorder 2, %s27
      // Predicated region
      $region109: #{tpu_custom_call.1} parent=5 // pred_check
        %p2031 = pneg %p2030
      $region110: #{tpu_custom_call.1} parent=5 // pred_check_branch
        %2033 = sbr.rel (%p2031) target = $region112
      $region111: #{tpu_custom_call.1} parent=5 // pred_region
        %s2034 = ssub.s32 %s27, 2
      $region112: #{tpu_custom_call.1} parent=5 // pred_fallthru
        _
    $region6: #{tpu_custom_call.1} parent=1 // loop_footer
      %s31 = sadd.s32 1, %s27
    $region7: #{tpu_custom_call.1} parent=1 // loop_footer_branch
      %26 = sbr.rel target = $region3
    $region8: #{tpu_custom_call.1} parent=1 // loop_exit
      _
    %2035 = vsyncpa [#allocation4], 1
    %s2036 = scalar_lea.sflag [#allocation4], 1
    %2037 = vsyncpa %s2036, 1
    %2038 = vsyncpa [#allocation7], 1
    %s2039 = scalar_lea.sflag [#allocation7], 1
    %2040 = vsyncpa %s2039, 1
    %2041 = vsyncpa [#allocation10], 1
    %s2042 = scalar_lea.sflag [#allocation10], 1
    %2043 = vsyncpa %s2042, 1
    %2044 = vsyncpa [#allocation5], 1
    %s2045 = scalar_lea.sflag [#allocation5], 1
    %2046 = vsyncpa %s2045, 1

</llo_original>
